<compile_context>
chip_gen: v6e
topology: v6e:2x2x1
jax: 0.10.0
libtpu: 0.0.40
codegen_flags: <defaults>
</compile_context>

<pallas_src>
import functools

import jax
import jax.numpy as jnp
from jax.experimental import pallas as pl
from jax.experimental.pallas import tpu as pltpu

SELU_ALPHA = 1.6732632423543772
SELU_SCALE = 1.0507009873554805


def _round_up(x, m):
    return ((x + m - 1) // m) * m


def _fused_sage_kernel(a_ref, x_ref, w_ref, b_ref, mask_ref, o_ref, h_ref,
                       *, tm, dp, last_act, a_resident):
    """Fused multi-layer SAGEConv('mean') forward.

    Grid: (n_layers, num_row_tiles) -- row tiles innermost, both sequential.

    a_ref    : resident (NP, NP) or streamed (tm, NP) bf16 degree-normalized A
    x_ref    : (NP, DP)     bf16  padded input features (resident)
    w_ref    : (2*DP, DP)   bf16  this layer's [W_self; W_neigh]
    b_ref    : (1, DP)      f32   this layer's bias
    mask_ref : (1, DP)      f32   1.0 on valid class columns
    o_ref    : (NP, DP)     f32   final padded output (resident)
    h_ref    : (2, NP, DP)  bf16  ping-pong inter-layer activation scratch
    """
    l = pl.program_id(0)
    r = pl.program_id(1)
    n_layers = pl.num_programs(0)
    row = pl.multiple_of(r * tm, tm)

    # One-shot seed of the layer-0 activation buffer with the input features.
    # (Layer 0's aggregation reads ALL of H, so the seed cannot be spread
    #  across row tiles.)
    @pl.when(jnp.logical_and(l == 0, r == 0))
    def _():
        h_ref[0] = x_ref[...]

    read_idx = l % 2          # layer l reads slot l%2, writes the other slot
    write_idx = 1 - read_idx

    if a_resident:
        a_tile = a_ref[pl.ds(row, tm), :]                                    # (tm, NP)
    else:
        a_tile = a_ref[...]                                                  # (tm, NP)

    # Mean aggregation (1/deg pre-folded into A): MXU, f32 accumulate.
    agg = jnp.dot(a_tile, h_ref[read_idx],
                  preferred_element_type=jnp.float32)                        # (tm, DP)

    # Self + neighbor projection as two accumulated MXU dots (no concatenate).
    h_tile = h_ref[read_idx, pl.ds(row, tm), :]                              # (tm, DP)
    out = jnp.dot(h_tile, w_ref[pl.ds(0, dp), :],
                  preferred_element_type=jnp.float32)
    out = out + jnp.dot(agg.astype(jnp.bfloat16), w_ref[pl.ds(dp, dp), :],
                        preferred_element_type=jnp.float32)
    out = out + b_ref[...]                                                   # (tm, DP)

    is_last = l == (n_layers - 1)

    @pl.when(jnp.logical_not(is_last))
    def _():
        act = SELU_SCALE * jnp.where(out > 0.0, out,
                                     SELU_ALPHA * (jnp.exp(out) - 1.0))
        h_ref[write_idx, pl.ds(row, tm), :] = act.astype(jnp.bfloat16)

    @pl.when(is_last)
    def _():
        if last_act == "softmax":
            valid = mask_ref[...] > 0.0                  # (1, DP) class columns
            logits = jnp.where(valid, out, jnp.float32(-1e30))
            m = jnp.max(logits, axis=1, keepdims=True)
            e = jnp.where(valid, jnp.exp(logits - m), 0.0)
            denom = jnp.sum(e, axis=1, keepdims=True)
            o_ref[pl.ds(row, tm), :] = (e / denom).astype(o_ref.dtype)
        else:  # "sigmoid" (n_classes == 1)
            sig = 1.0 / (1.0 + jnp.exp(-out))
            o_ref[pl.ds(row, tm), :] = sig.astype(o_ref.dtype)


def _pack_params(params, dp):
    """Stack per-layer (W_self, W_neigh, bias) into padded, lane-dense tensors."""
    n_layers = len(params)
    w_all = jnp.zeros((n_layers, 2 * dp, dp), jnp.float32)
    b_all = jnp.zeros((n_layers, 1, dp), jnp.float32)
    for i, (w_self, w_neigh, bias) in enumerate(params):
        din, dout = w_self.shape
        w_all = w_all.at[i, :din, :dout].set(w_self)
        w_all = w_all.at[i, dp:dp + din, :dout].set(w_neigh)
        b_all = b_all.at[i, 0, :dout].set(bias.reshape(-1))
    return w_all.astype(jnp.bfloat16), b_all


def _vmem_budget_bytes():
    """~3/4 of per-core VMEM (128 MiB on v5e/v6e, 64 MiB on v7x)."""
    try:
        cap = int(pltpu.get_tpu_info().vmem_capacity_bytes)
    except Exception:
        cap = 0
    if cap <= 0:
        cap = 64 * 1024 * 1024   # conservative fallback (v7x per-TC)
    return (cap * 3) // 4


def _vmem_bytes_estimate(np_, dp, tm, a_resident):
    """Conservative VMEM footprint (constant-index blocks counted double-buffered)."""
    a = 2 * np_ * np_ * 2 if a_resident else 2 * tm * np_ * 2
    x = 2 * np_ * dp * 2
    out = 2 * np_ * dp * 4
    h = 2 * np_ * dp * 2           # scratch, single copy
    w = 2 * (2 * dp * dp * 2)
    misc = 4 * dp * 4
    return a + x + out + h + w + misc


def _pick_tm(np_, tm_req):
    """Largest multiple of 128 that divides np_ and is <= tm_req (>= 128)."""
    tm = min(_round_up(max(int(tm_req), 128), 128), np_)
    while np_ % tm != 0:
        tm -= 128
    return tm


def graphsage_full_forward(adj, x, params, n_classes, *, tm=256, a_resident=None):
    """Forward pass of GraphSageFull as one fused Pallas call."""
    n = adj.shape[0]
    n_layers = len(params)
    in_feats = params[0][0].shape[0]
    dims = [in_feats] + [w_self.shape[1] for (w_self, _, _) in params]
    dp = _round_up(max(dims), 128)               # lane-dense padded feature dim

    # Degree normalization from the exact f32 adjacency, folded into A once.
    adj_f32 = adj.astype(jnp.float32)
    deg = jnp.sum(adj_f32, axis=1, keepdims=True)
    deg_inv = 1.0 / jnp.maximum(deg, 1.0)
    a_norm = adj_f32 * deg_inv                   # row (dst) scaling

    # Pad node count to a multiple of 128 (lane-dense A / H tiles); tm divides NP.
    np_ = _round_up(n, 128)
    tm = _pick_tm(np_, tm)

    budget = _vmem_budget_bytes()
    if a_resident is None:
        a_resident = _vmem_bytes_estimate(np_, dp, tm, True) <= budget
    if not a_resident:
        # Shrink streamed row tiles until the double-buffered A tiles fit.
        while tm > 128 and _vmem_bytes_estimate(np_, dp, tm, False) > budget:
            tm = _pick_tm(np_, tm - 128)
    num_row_tiles = np_ // tm

    a_pad = jnp.zeros((np_, np_), jnp.bfloat16).at[:n, :n].set(
        a_norm.astype(jnp.bfloat16))
    x_pad = jnp.zeros((np_, dp), jnp.bfloat16).at[:n, :in_feats].set(
        x.astype(jnp.bfloat16))
    w_all, b_all = _pack_params(params, dp)
    cls_mask = jnp.zeros((1, dp), jnp.float32).at[0, :n_classes].set(1.0)

    last_act = "softmax" if n_classes > 1 else "sigmoid"
    kernel = functools.partial(_fused_sage_kernel, tm=tm, dp=dp,
                               last_act=last_act, a_resident=a_resident)

    if a_resident:
        a_spec = pl.BlockSpec((np_, np_), lambda l, r: (0, 0))      # loaded once
    else:
        a_spec = pl.BlockSpec((tm, np_), lambda l, r: (r, 0))       # pipelined tiles

    out_padded = pl.pallas_call(
        kernel,
        out_shape=jax.ShapeDtypeStruct((np_, dp), jnp.float32),
        grid=(n_layers, num_row_tiles),
        in_specs=[
            a_spec,                                                   # A_norm (bf16)
            pl.BlockSpec((np_, dp), lambda l, r: (0, 0)),             # x (resident)
            pl.BlockSpec((None, 2 * dp, dp), lambda l, r: (l, 0, 0)),  # W per layer
            pl.BlockSpec((None, 1, dp), lambda l, r: (l, 0, 0)),      # bias per layer
            pl.BlockSpec((1, dp), lambda l, r: (0, 0)),               # class mask
        ],
        out_specs=pl.BlockSpec((np_, dp), lambda l, r: (0, 0)),       # resident output
        scratch_shapes=[
            pltpu.VMEM((2, np_, dp), jnp.bfloat16),                   # H ping-pong
        ],
        compiler_params=pltpu.CompilerParams(
            # Cross-layer dependency flows through the VMEM scratch, and every
            # row tile reads the full previous-layer H -> both axes sequential.
            dimension_semantics=("arbitrary", "arbitrary"),
            vmem_limit_bytes=int(budget),
        ),
    )(a_pad, x_pad, w_all, b_all, cls_mask)

    return out_padded[:n, :n_classes]


def _reference_forward(adj, x, params, n_classes):
    """Pure-JAX f32 reference with identical semantics (for validation)."""
    deg = jnp.sum(adj, axis=1, keepdims=True)
    deg_inv = 1.0 / jnp.maximum(deg, 1.0)
    a_norm = adj * deg_inv
    h = x
    n_layers = len(params)
    for i, (w_self, w_neigh, bias) in enumerate(params):
        out = h @ w_self + (a_norm @ h) @ w_neigh + bias
        if i < n_layers - 1:
            h = SELU_SCALE * jnp.where(out > 0, out, SELU_ALPHA * (jnp.exp(out) - 1.0))
        else:
            h = jax.nn.softmax(out, axis=1) if n_classes > 1 else jax.nn.sigmoid(out)
    return h


def init_params(key, in_feats, n_hidden, n_classes, n_layers):
    """Deterministic xavier-ish init for each SAGEConv layer."""
    dims = [in_feats] + [n_hidden] * (n_layers - 1) + [n_classes]
    params = []
    for i in range(n_layers):
        din, dout = dims[i], dims[i + 1]
        key, k1, k2 = jax.random.split(key, 3)
        scale = (2.0 / (din + dout)) ** 0.5
        w_self = scale * jax.random.normal(k1, (din, dout), jnp.float32)
        w_neigh = scale * jax.random.normal(k2, (din, dout), jnp.float32)
        bias = jnp.zeros((1, dout), jnp.float32)
        params.append((w_self, w_neigh, bias))
    return params


if __name__ == "__main__":
    # Small synthetic graph: N=192 nodes (exercises 128-padding), in_feats=16,
    # hidden=32, 8 classes, 3 layers; tm=128 -> 2 row tiles.
    N, IN_FEATS, N_HIDDEN, N_CLASSES, N_LAYERS = 192, 16, 32, 8, 3

    key = jax.random.PRNGKey(0)
    key, k_adj, k_x, k_p = jax.random.split(key, 4)

    # Random directed adjacency (dst, src), ~20% density.
    adj = (jax.random.uniform(k_adj, (N, N)) < 0.2).astype(jnp.float32)
    x = jax.random.normal(k_x, (N, IN_FEATS), jnp.float32)
    params = init_params(k_p, IN_FEATS, N_HIDDEN, N_CLASSES, N_LAYERS)

    # Resident-A (default) fused forward.
    out = graphsage_full_forward(adj, x, params, N_CLASSES, tm=128)
    out = jax.block_until_ready(out)

    assert out.shape == (N, N_CLASSES)
    assert bool(jnp.all(jnp.isfinite(out)))
    # Softmax rows (exact f32 normalization) must sum to ~1.
    row_sums = jnp.sum(out, axis=1)
    assert bool(jnp.all(jnp.abs(row_sums - 1.0) < 1e-3))

    # Streamed-A mode must agree with the resident-A mode.
    out_streamed = graphsage_full_forward(adj, x, params, N_CLASSES, tm=128,
                                          a_resident=False)
    out_streamed = jax.block_until_ready(out_streamed)
    assert bool(jnp.all(jnp.abs(out - out_streamed) < 1e-5))

    # Loose agreement with the pure-f32 reference (kernel runs in bf16).
    ref = _reference_forward(adj, x, params, N_CLASSES)
    assert bool(jnp.all(jnp.abs(out - ref) < 0.1))

    print("KERNEL_OK")
</pallas_src>

<mosaic_0001>
module attributes {stable_mosaic.version = 11 : i64} {
  func.func @_fused_sage_kernel(%arg0: i32, %arg1: i32, %arg2: memref<256x256xbf16, #tpu.memory_space<vmem>>, %arg3: memref<256x128xbf16, #tpu.memory_space<vmem>>, %arg4: memref<1x256x128xbf16, #tpu.memory_space<vmem>>, %arg5: memref<1x1x128xf32, #tpu.memory_space<vmem>>, %arg6: memref<1x128xf32, #tpu.memory_space<vmem>>, %arg7: memref<256x128xf32, #tpu.memory_space<vmem>>, %arg8: memref<2x256x128xbf16, #tpu.memory_space<vmem>>) attributes {dimension_semantics = [#tpu.dimension_semantics<arbitrary>, #tpu.dimension_semantics<arbitrary>], iteration_bounds = array<i64: 3, 2>, scalar_prefetch = 0 : i64, scratch_operands = 1 : i64, tpu.core_type = #tpu.core_type<tc>, window_params = [{pipeline_mode = #tpu.pipeline_mode<synchronous>, transform_indices = @transform_0, window_bounds = array<i64: 256, 256>}, {pipeline_mode = #tpu.pipeline_mode<synchronous>, transform_indices = @transform_1, window_bounds = array<i64: 256, 128>}, {transform_indices = @transform_2, window_bounds = array<i64: 1, 256, 128>}, {transform_indices = @transform_3, window_bounds = array<i64: 1, 1, 128>}, {pipeline_mode = #tpu.pipeline_mode<synchronous>, transform_indices = @transform_4, window_bounds = array<i64: 1, 128>}, {pipeline_mode = #tpu.pipeline_mode<synchronous>, transform_indices = @transform_5, window_bounds = array<i64: 256, 128>}]} {
    %c128_i32 = arith.constant 128 : i32
    %0 = arith.muli %arg1, %c128_i32 : i32
    %1 = tpu.assume_multiple %0, 128 : i32
    %c0_i32 = arith.constant 0 : i32
    %2 = arith.cmpi eq, %arg0, %c0_i32 : i32
    %c0_i32_0 = arith.constant 0 : i32
    %3 = arith.cmpi eq, %arg1, %c0_i32_0 : i32
    %4 = arith.andi %2, %3 : i1
    %5 = arith.extui %4 : i1 to i32
    %c0_i32_1 = arith.constant 0 : i32
    %6 = arith.cmpi ne, %5, %c0_i32_1 : i32
    scf.if %6 {
      %c0_23 = arith.constant 0 : index
      %c0_24 = arith.constant 0 : index
      %46 = vector.load %arg3[%c0_23, %c0_24] : memref<256x128xbf16, #tpu.memory_space<vmem>>, vector<256x128xbf16>
      %c0_25 = arith.constant 0 : index
      %c0_26 = arith.constant 0 : index
      %c0_27 = arith.constant 0 : index
      %47 = vector.load %arg8[%c0_25, %c0_26, %c0_27] : memref<2x256x128xbf16, #tpu.memory_space<vmem>>, vector<1x256x128xbf16>
      %48 = vector.shape_cast %47 : vector<1x256x128xbf16> to vector<256x128xbf16>
      %49 = vector.shape_cast %46 : vector<256x128xbf16> to vector<1x256x128xbf16>
      tpu.vector_store %arg8[%c0_25, %c0_26, %c0_27], %49 {strides = array<i32>} : memref<2x256x128xbf16, #tpu.memory_space<vmem>>, vector<1x256x128xbf16>,
    } else {
    }
    %c2_i32 = arith.constant 2 : i32
    %c0_i32_2 = arith.constant 0 : i32
    %7 = arith.cmpi eq, %c2_i32, %c0_i32_2 : i32
    %c1_i32 = arith.constant 1 : i32
    %8 = arith.select %7, %c1_i32, %c2_i32 : i32
    %9 = arith.remsi %arg0, %8 : i32
    %c0_i32_3 = arith.constant 0 : i32
    %10 = arith.cmpi ne, %9, %c0_i32_3 : i32
    %c0_i32_4 = arith.constant 0 : i32
    %11 = arith.cmpi slt, %9, %c0_i32_4 : i32
    %c0_i32_5 = arith.constant 0 : i32
    %12 = arith.cmpi slt, %8, %c0_i32_5 : i32
    %13 = arith.xori %11, %12 : i1
    %14 = arith.andi %13, %10 : i1
    %15 = arith.addi %9, %8 : i32
    %16 = arith.select %14, %15, %9 : i32
    %c1_i32_6 = arith.constant 1 : i32
    %17 = arith.subi %c1_i32_6, %16 : i32
    %18 = arith.index_cast %1 : i32 to index
    %c0 = arith.constant 0 : index
    %19 = vector.load %arg2[%18, %c0] : memref<256x256xbf16, #tpu.memory_space<vmem>>, vector<128x256xbf16>
    %20 = arith.index_cast %16 : i32 to index
    %c0_7 = arith.constant 0 : index
    %c0_8 = arith.constant 0 : index
    %21 = vector.load %arg8[%20, %c0_7, %c0_8] : memref<2x256x128xbf16, #tpu.memory_space<vmem>>, vector<1x256x128xbf16>
    %22 = vector.shape_cast %21 : vector<1x256x128xbf16> to vector<256x128xbf16>
    %cst = arith.constant dense<0.000000e+00> : vector<128x128xf32>
    %23 = tpu.matmul %19, %22, %cst {dimension_numbers = #tpu.dot_dimension_numbers<[1], [0], [0], [1], [0, 0, 1, 1], [], []>} : vector<128x256xbf16>, vector<256x128xbf16>, vector<128x128xf32> -> vector<128x128xf32>
    %24 = arith.index_cast %16 : i32 to index
    %25 = arith.index_cast %1 : i32 to index
    %c0_9 = arith.constant 0 : index
    %26 = vector.load %arg8[%24, %25, %c0_9] : memref<2x256x128xbf16, #tpu.memory_space<vmem>>, vector<1x128x128xbf16>
    %27 = vector.shape_cast %26 : vector<1x128x128xbf16> to vector<128x128xbf16>
    %c0_10 = arith.constant 0 : index
    %c0_11 = arith.constant 0 : index
    %c0_12 = arith.constant 0 : index
    %28 = vector.load %arg4[%c0_10, %c0_11, %c0_12] : memref<1x256x128xbf16, #tpu.memory_space<vmem>>, vector<1x128x128xbf16>
    %29 = vector.shape_cast %28 : vector<1x128x128xbf16> to vector<128x128xbf16>
    %cst_13 = arith.constant dense<0.000000e+00> : vector<128x128xf32>
    %30 = tpu.matmul %27, %29, %cst_13 {dimension_numbers = #tpu.dot_dimension_numbers<[1], [0], [0], [1], [0, 0, 1, 1], [], []>} : vector<128x128xbf16>, vector<128x128xbf16>, vector<128x128xf32> -> vector<128x128xf32>
    %31 = arith.truncf %23 : vector<128x128xf32> to vector<128x128xbf16>
    %c0_14 = arith.constant 0 : index
    %c128 = arith.constant 128 : index
    %c0_15 = arith.constant 0 : index
    %32 = vector.load %arg4[%c0_14, %c128, %c0_15] : memref<1x256x128xbf16, #tpu.memory_space<vmem>>, vector<1x128x128xbf16>
    %33 = vector.shape_cast %32 : vector<1x128x128xbf16> to vector<128x128xbf16>
    %cst_16 = arith.constant dense<0.000000e+00> : vector<128x128xf32>
    %34 = tpu.matmul %31, %33, %cst_16 {dimension_numbers = #tpu.dot_dimension_numbers<[1], [0], [0], [1], [0, 0, 1, 1], [], []>} : vector<128x128xbf16>, vector<128x128xbf16>, vector<128x128xf32> -> vector<128x128xf32>
    %35 = arith.addf %30, %34 : vector<128x128xf32>
    %c0_17 = arith.constant 0 : index
    %c0_18 = arith.constant 0 : index
    %c0_19 = arith.constant 0 : index
    %36 = vector.load %arg5[%c0_17, %c0_18, %c0_19] : memref<1x1x128xf32, #tpu.memory_space<vmem>>, vector<1x1x128xf32>
    %37 = vector.shape_cast %36 : vector<1x1x128xf32> to vector<1x128xf32>
    %38 = vector.broadcast %37 : vector<1x128xf32> to vector<128x128xf32>
    %39 = arith.addf %35, %38 : vector<128x128xf32>
    %c2_i32_20 = arith.constant 2 : i32
    %40 = arith.cmpi eq, %arg0, %c2_i32_20 : i32
    %true = arith.constant true
    %41 = arith.xori %40, %true : i1
    %42 = arith.extui %41 : i1 to i32
    %c0_i32_21 = arith.constant 0 : i32
    %43 = arith.cmpi ne, %42, %c0_i32_21 : i32
    scf.if %43 {
      %cst_23 = arith.constant 0.000000e+00 : f32
      %46 = vector.broadcast %cst_23 : f32 to vector<128x128xf32>
      %47 = arith.cmpf ogt, %39, %46 : vector<128x128xf32>
      %48 = math.exp %39 : vector<128x128xf32>
      %cst_24 = arith.constant 1.000000e+00 : f32
      %49 = vector.broadcast %cst_24 : f32 to vector<128x128xf32>
      %50 = arith.subf %48, %49 : vector<128x128xf32>
      %cst_25 = arith.constant 1.67326319 : f32
      %51 = vector.broadcast %cst_25 : f32 to vector<128x128xf32>
      %52 = arith.mulf %51, %50 : vector<128x128xf32>
      %53 = arith.select %47, %39, %52 : vector<128x128xi1>, vector<128x128xf32>
      %cst_26 = arith.constant 1.05070102 : f32
      %54 = vector.broadcast %cst_26 : f32 to vector<128x128xf32>
      %55 = arith.mulf %54, %53 : vector<128x128xf32>
      %56 = arith.truncf %55 : vector<128x128xf32> to vector<128x128xbf16>
      %57 = arith.index_cast %17 : i32 to index
      %58 = arith.index_cast %1 : i32 to index
      %c0_27 = arith.constant 0 : index
      %59 = vector.load %arg8[%57, %58, %c0_27] : memref<2x256x128xbf16, #tpu.memory_space<vmem>>, vector<1x128x128xbf16>
      %60 = vector.shape_cast %59 : vector<1x128x128xbf16> to vector<128x128xbf16>
      %61 = vector.shape_cast %56 : vector<128x128xbf16> to vector<1x128x128xbf16>
      tpu.vector_store %arg8[%57, %58, %c0_27], %61 {strides = array<i32>} : memref<2x256x128xbf16, #tpu.memory_space<vmem>>, vector<1x128x128xbf16>,
    } else {
    }
    %44 = arith.extui %40 : i1 to i32
    %c0_i32_22 = arith.constant 0 : i32
    %45 = arith.cmpi ne, %44, %c0_i32_22 : i32
    scf.if %45 {
      %c0_23 = arith.constant 0 : index
      %c0_24 = arith.constant 0 : index
      %46 = vector.load %arg6[%c0_23, %c0_24] : memref<1x128xf32, #tpu.memory_space<vmem>>, vector<1x128xf32>
      %cst_25 = arith.constant 0.000000e+00 : f32
      %47 = vector.broadcast %cst_25 : f32 to vector<1x128xf32>
      %48 = arith.cmpf ogt, %46, %47 : vector<1x128xf32>
      %cst_26 = arith.constant -1.000000e+30 : f32
      %49 = vector.shape_cast %48 : vector<1x128xi1> to vector<1x128xi1>
      %50 = vector.broadcast %49 : vector<1x128xi1> to vector<128x128xi1>
      %51 = vector.broadcast %cst_26 : f32 to vector<128x128xf32>
      %52 = arith.select %50, %39, %51 : vector<128x128xi1>, vector<128x128xf32>
      %cst_27 = arith.constant dense<0xFF800000> : vector<128xf32>
      %53 = vector.multi_reduction <maximumf>, %52, %cst_27 [1] : vector<128x128xf32> to vector<128xf32>
      %54 = vector.shape_cast %53 : vector<128xf32> to vector<128x1xf32>
      %55 = vector.broadcast %54 : vector<128x1xf32> to vector<128x128xf32>
      %56 = arith.subf %52, %55 : vector<128x128xf32>
      %57 = math.exp %56 : vector<128x128xf32>
      %cst_28 = arith.constant 0.000000e+00 : f32
      %58 = vector.shape_cast %48 : vector<1x128xi1> to vector<1x128xi1>
      %59 = vector.broadcast %58 : vector<1x128xi1> to vector<128x128xi1>
      %60 = vector.broadcast %cst_28 : f32 to vector<128x128xf32>
      %61 = arith.select %59, %57, %60 : vector<128x128xi1>, vector<128x128xf32>
      %cst_29 = arith.constant dense<0.000000e+00> : vector<128xf32>
      %62 = vector.multi_reduction <add>, %61, %cst_29 [1] : vector<128x128xf32> to vector<128xf32>
      %63 = vector.shape_cast %62 : vector<128xf32> to vector<128x1xf32>
      %64 = vector.broadcast %63 : vector<128x1xf32> to vector<128x128xf32>
      %65 = arith.divf %61, %64 : vector<128x128xf32>
      %66 = arith.index_cast %1 : i32 to index
      %c0_30 = arith.constant 0 : index
      %67 = vector.load %arg7[%66, %c0_30] : memref<256x128xf32, #tpu.memory_space<vmem>>, vector<128x128xf32>
      tpu.vector_store %arg7[%66, %c0_30], %65 {strides = array<i32>} : memref<256x128xf32, #tpu.memory_space<vmem>>, vector<128x128xf32>,
    } else {
    }
    return
  }
  func.func @transform_0(%arg0: i32, %arg1: i32) -> (i32, i32) {
    %c0_i32 = arith.constant 0 : i32
    %c0_i32_0 = arith.constant 0 : i32
    %c0_i32_1 = arith.constant 0 : i32
    return %c0_i32, %c0_i32_0 : i32, i32
  }
  func.func @transform_1(%arg0: i32, %arg1: i32) -> (i32, i32) {
    %c0_i32 = arith.constant 0 : i32
    %c0_i32_0 = arith.constant 0 : i32
    %c0_i32_1 = arith.constant 0 : i32
    return %c0_i32, %c0_i32_0 : i32, i32
  }
  func.func @transform_2(%arg0: i32, %arg1: i32) -> (i32, i32, i32) {
    %c0_i32 = arith.constant 0 : i32
    %c0_i32_0 = arith.constant 0 : i32
    %c0_i32_1 = arith.constant 0 : i32
    return %arg0, %c0_i32, %c0_i32_0 : i32, i32, i32
  }
  func.func @transform_3(%arg0: i32, %arg1: i32) -> (i32, i32, i32) {
    %c0_i32 = arith.constant 0 : i32
    %c0_i32_0 = arith.constant 0 : i32
    %c0_i32_1 = arith.constant 0 : i32
    return %arg0, %c0_i32, %c0_i32_0 : i32, i32, i32
  }
  func.func @transform_4(%arg0: i32, %arg1: i32) -> (i32, i32) {
    %c0_i32 = arith.constant 0 : i32
    %c0_i32_0 = arith.constant 0 : i32
    %c0_i32_1 = arith.constant 0 : i32
    return %c0_i32, %c0_i32_0 : i32, i32
  }
  func.func @transform_5(%arg0: i32, %arg1: i32) -> (i32, i32) {
    %c0_i32 = arith.constant 0 : i32
    %c0_i32_0 = arith.constant 0 : i32
    %c0_i32_1 = arith.constant 0 : i32
    return %c0_i32, %c0_i32_0 : i32, i32
  }
}

</mosaic_0001>

<llo_original>
// kernel: tpu_custom_call.1
$region0: #{tpu_custom_call.1}
  #allocation0 [shape = 'u32[]', space=smem, size = 0x4, offset = 0x4, fixed_abs, tag = 'smem constant byte address 0x4 - core index']
  #allocation1 [shape = 'u32[144,128]{1,0:T(1,128)}', space=vmem, size = 0x12000, scoped, tag = 'internal scratch']
  #allocation2 [shape = 'bf16[2,256,128]{2,1,0:T(8,128)(2,1)}', space=vmem, size = 0x20000, scoped, tag = 'scratch operand']
  %s0 = inlined_call_operand.hbm [shape: bf16[256,256], index: 0, kind: input, shape index: {}]
  %s1 = inlined_call_operand.hbm [shape: bf16[256,128], index: 1, kind: input, shape index: {}]
  %s2 = inlined_call_operand.hbm [shape: bf16[3,256,128], index: 2, kind: input, shape index: {}]
  %s3 = inlined_call_operand.vmem [shape: f32[3,1,128], index: 3, kind: input, shape index: {}]
  %s4 = inlined_call_operand.vmem [shape: f32[1,128], index: 4, kind: input, shape index: {}]
  %s5 = inlined_call_operand.hbm [shape: f32[256,128], index: 5, kind: output, shape index: {}]
  %s6 = sld [smem:[#allocation0]]
  $region77: #{tpu_custom_call.1} parent=0
    _
  %s8 = ssub.s32 1, %s6
  %s9 = scalar_select 0, %s8, %s6
  $region1: #{tpu_custom_call.1} parent=0
    #allocation3 [shape = 'u8[131072]{0}', space=vmem, size = 0x20000, scoped, tag = 'input window, operand 0, single buffered']
    #allocation4 [shape = 's32[2]{0}', space=sflag, size = 0x8, scoped, tag = 'scoped memory for tpu_custom_call.1']
    #allocation5 [shape = 's32[2]{0}', space=sflag, size = 0x8, scoped, tag = 'scoped memory for tpu_custom_call.1']
    #allocation6 [shape = 'u8[65536]{0}', space=vmem, size = 0x10000, scoped, tag = 'input window, operand 1, single buffered']
    #allocation7 [shape = 's32[1]{0}', space=sflag, size = 0x4, scoped, tag = 'scoped memory for tpu_custom_call.1']
    #allocation8 [shape = 'u8[131072]{0}', space=vmem, size = 0x20000, scoped, tag = 'input window, operand 2']
    #allocation9 [shape = 'u8[131072]{0}', space=vmem, size = 0x20000, scoped, tag = 'output window, operand 0, single buffered']
    %10 = vsyncpa [#allocation4], 0
    %11 = vsyncpa [#allocation7], 0
    %12 = vsyncpa [#allocation5], 0
    loop: start=0, step=1, limit=8
    $region2: #{tpu_custom_call.1} parent=1 // loop_pre_header
      _
    $region3: #{tpu_custom_call.1} parent=1 // loop_header
      %s14 = sphi 0, %s18
      %p15 = scmp.ge.s32.totalorder %s14, 8
      %s21 = sphi 0, %s33
      %s22 = sphi 0, %s29
      %s23 = sphi 0, %s21
      %s24 = sphi 0, %s22
      %s25 = sphi 0, %s23
      %s26 = sphi 0, %s24
      %s34 = sphi 0, %s34
      %s36 = sphi 0, %s34
      %s37 = sphi 0, %s36
      %s51 = sphi 0, %s37
      %s55 = sphi 0, %s55
      %s57 = sphi 0, %s55
      %s58 = sphi 0, %s57
      %s72 = sphi 0, %s58
      %s78 = sphi 0, %s80
      %s81 = sphi 0, %s78
      %s82 = sphi 0, %s81
      %s98 = sphi 0, %s82
      %s104 = sphi 0, %s106
      %s107 = sphi 0, %s104
      %s108 = sphi 0, %s107
      %s124 = sphi 0, %s108
      %s128 = sphi 0, %s128
      %s130 = sphi 0, %s128
      %s131 = sphi 0, %s130
      %s145 = sphi 0, %s131
      %s149 = sphi 0, %s149
      %s151 = sphi 0, %s149
      %s152 = sphi 0, %s151
      %s166 = sphi 0, %s152
    $region4: #{tpu_custom_call.1} parent=1 // loop_header_branch
      %17 = sbr.rel (%p15) target = $region8
    $region5: #{tpu_custom_call.1} parent=1 // loop_body
      %s19 = ssub.s32 %s14, 1
      %s20 = ssub.s32 %s14, 2
      %s27 = sadd.s32 1, %s22
      %p28 = scmp.ge.s32.totalorder %s27, 2
      %s29 = scalar_select %p28, 0, %s27
      %s30 = sadd.s32 1, %s21
      %s31 = scalar_select %p28, %s30, %s21
      %p32 = scmp.ge.s32.totalorder %s31, 3
      %s33 = scalar_select %p32, 0, %s31
      %s35 = sadd.s32 %s34, 1
      %p38 = scmp.eq.s32.totalorder %s14, 5
      %p39 = scmp.ne.s32.totalorder %s34, %s36
      %p40 = scmp.eq.s32.totalorder %s14, 0
      %p41 = por %p39, %p40
      %p42 = scmp.ne.s32.totalorder %s34, %s36
      %p43 = scmp.eq.s32.totalorder %s19, 5
      %p44 = por %p42, %p43
      %p45 = scmp.ne.s32.totalorder %s36, %s37
      %p46 = scmp.eq.s32.totalorder %s19, 0
      %p47 = por %p45, %p46
      %p48 = scmp.ne.s32.totalorder %s36, %s37
      %p49 = scmp.eq.s32.totalorder %s20, 5
      %p50 = por %p48, %p49
      %p52 = scmp.ne.s32.totalorder %s37, %s51
      %p53 = scmp.eq.s32.totalorder %s20, 0
      %p54 = por %p52, %p53
      %s56 = sadd.s32 %s55, 1
      %p59 = scmp.eq.s32.totalorder %s14, 5
      %p60 = scmp.ne.s32.totalorder %s55, %s57
      %p61 = scmp.eq.s32.totalorder %s14, 0
      %p62 = por %p60, %p61
      %p63 = scmp.ne.s32.totalorder %s55, %s57
      %p64 = scmp.eq.s32.totalorder %s19, 5
      %p65 = por %p63, %p64
      %p66 = scmp.ne.s32.totalorder %s57, %s58
      %p67 = scmp.eq.s32.totalorder %s19, 0
      %p68 = por %p66, %p67
      %p69 = scmp.ne.s32.totalorder %s57, %s58
      %p70 = scmp.eq.s32.totalorder %s20, 5
      %p71 = por %p69, %p70
      %p73 = scmp.ne.s32.totalorder %s58, %s72
      %p74 = scmp.eq.s32.totalorder %s20, 0
      %p75 = por %p73, %p74
      %s76 = ssub.s32 %s21, %s33
      %p77 = scmp.eq.s32.totalorder %s76, 0
      %s79 = sadd.s32 %s78, 1
      %s80 = scalar_select %p77, %s78, %s79
      %p83 = pneg %p77
      %p84 = scmp.eq.s32.totalorder %s14, 5
      %p85 = por %p83, %p84
      %p86 = scmp.ne.s32.totalorder %s78, %s81
      %p87 = scmp.eq.s32.totalorder %s14, 0
      %p88 = por %p86, %p87
      %p89 = scmp.ne.s32.totalorder %s78, %s81
      %p90 = scmp.eq.s32.totalorder %s19, 5
      %p91 = por %p89, %p90
      %p92 = scmp.ne.s32.totalorder %s81, %s82
      %p93 = scmp.eq.s32.totalorder %s19, 0
      %p94 = por %p92, %p93
      %p95 = scmp.ne.s32.totalorder %s81, %s82
      %p96 = scmp.eq.s32.totalorder %s20, 5
      %p97 = por %p95, %p96
      %p99 = scmp.ne.s32.totalorder %s82, %s98
      %p100 = scmp.eq.s32.totalorder %s20, 0
      %p101 = por %p99, %p100
      %s102 = ssub.s32 %s21, %s33
      %p103 = scmp.eq.s32.totalorder %s102, 0
      %s105 = sadd.s32 %s104, 1
      %s106 = scalar_select %p103, %s104, %s105
      %p109 = pneg %p103
      %p110 = scmp.eq.s32.totalorder %s14, 5
      %p111 = por %p109, %p110
      %p112 = scmp.ne.s32.totalorder %s104, %s107
      %p113 = scmp.eq.s32.totalorder %s14, 0
      %p114 = por %p112, %p113
      %p115 = scmp.ne.s32.totalorder %s104, %s107
      %p116 = scmp.eq.s32.totalorder %s19, 5
      %p117 = por %p115, %p116
      %p118 = scmp.ne.s32.totalorder %s107, %s108
      %p119 = scmp.eq.s32.totalorder %s19, 0
      %p120 = por %p118, %p119
      %p121 = scmp.ne.s32.totalorder %s107, %s108
      %p122 = scmp.eq.s32.totalorder %s20, 5
      %p123 = por %p121, %p122
      %p125 = scmp.ne.s32.totalorder %s108, %s124
      %p126 = scmp.eq.s32.totalorder %s20, 0
      %p127 = por %p125, %p126
      %s129 = sadd.s32 %s128, 1
      %p132 = scmp.eq.s32.totalorder %s14, 5
      %p133 = scmp.ne.s32.totalorder %s128, %s130
      %p134 = scmp.eq.s32.totalorder %s14, 0
      %p135 = por %p133, %p134
      %p136 = scmp.ne.s32.totalorder %s128, %s130
      %p137 = scmp.eq.s32.totalorder %s19, 5
      %p138 = por %p136, %p137
      %p139 = scmp.ne.s32.totalorder %s130, %s131
      %p140 = scmp.eq.s32.totalorder %s19, 0
      %p141 = por %p139, %p140
      %p142 = scmp.ne.s32.totalorder %s130, %s131
      %p143 = scmp.eq.s32.totalorder %s20, 5
      %p144 = por %p142, %p143
      %p146 = scmp.ne.s32.totalorder %s131, %s145
      %p147 = scmp.eq.s32.totalorder %s20, 0
      %p148 = por %p146, %p147
      %s150 = sadd.s32 %s149, 1
      %p153 = scmp.eq.s32.totalorder %s14, 5
      %p154 = scmp.ne.s32.totalorder %s149, %s151
      %p155 = scmp.eq.s32.totalorder %s14, 0
      %p156 = por %p154, %p155
      %p157 = scmp.ne.s32.totalorder %s149, %s151
      %p158 = scmp.eq.s32.totalorder %s19, 5
      %p159 = por %p157, %p158
      %p160 = scmp.ne.s32.totalorder %s151, %s152
      %p161 = scmp.eq.s32.totalorder %s19, 0
      %p162 = por %p160, %p161
      %p163 = scmp.ne.s32.totalorder %s151, %s152
      %p164 = scmp.eq.s32.totalorder %s20, 5
      %p165 = por %p163, %p164
      %p167 = scmp.ne.s32.totalorder %s152, %s166
      %p168 = scmp.eq.s32.totalorder %s20, 0
      %p169 = por %p167, %p168
      %p170 = scmp.le.s32.totalorder 1, %s14
      %p171 = scmp.lt.s32.totalorder %s14, 7
      %p172 = pnand %p170, %p171
      %p173 = pneg %p172
      // Predicated region
      $region9: #{tpu_custom_call.1} parent=5 // pred_check
        _
      $region10: #{tpu_custom_call.1} parent=5 // pred_check_branch
        %175 = sbr.rel (%p172) target = $region12
      $region11: #{tpu_custom_call.1} parent=5 // pred_region
        %s176 = ssub.s32 %s14, 1
        // Predicated region
        $region13: #{tpu_custom_call.1} parent=11 // pred_check
          %p177 = pneg %p47
        $region14: #{tpu_custom_call.1} parent=11 // pred_check_branch
          %179 = sbr.rel (%p177) target = $region16
        $region15: #{tpu_custom_call.1} parent=11 // pred_region
          %s181 = ssub.s32 4096, 4096
          %182 = vsyncadd [#allocation4], %s181
          %s183 = sshll.u32 [#allocation3], 4
          %s184 = int_to_ptr.vmem [resolvable:$true] %s183
          %189 = dma.hbm_to_vmem [thread:$0]  %s0, 4096, %s184, [#allocation4], 128, 128, 8
        $region16: #{tpu_custom_call.1} parent=11 // pred_fallthru
          _
        // Predicated region
        $region17: #{tpu_custom_call.1} parent=11 // pred_check
          %p190 = pneg %p68
        $region18: #{tpu_custom_call.1} parent=11 // pred_check_branch
          %192 = sbr.rel (%p190) target = $region20
        $region19: #{tpu_custom_call.1} parent=11 // pred_region
          %s194 = ssub.s32 2048, 2048
          %195 = vsyncadd [#allocation7], %s194
          %s196 = sshll.u32 [#allocation6], 4
          %s197 = int_to_ptr.vmem [resolvable:$true] %s196
          %202 = dma.hbm_to_vmem [thread:$0]  %s1, 2048, %s197, [#allocation7], 64, 64, 4
        $region20: #{tpu_custom_call.1} parent=11 // pred_fallthru
          _
        // Predicated region
        $region21: #{tpu_custom_call.1} parent=11 // pred_check
          %p203 = pneg %p141
        $region22: #{tpu_custom_call.1} parent=11 // pred_check_branch
          %205 = sbr.rel (%p203) target = $region24
        $region23: #{tpu_custom_call.1} parent=11 // pred_region
          _
        $region24: #{tpu_custom_call.1} parent=11 // pred_fallthru
          _
      $region12: #{tpu_custom_call.1} parent=5 // pred_fallthru
        _
      %p206 = scmp.lt.s32.totalorder %s14, 6
      // Predicated region
      $region25: #{tpu_custom_call.1} parent=5 // pred_check
        %p207 = pneg %p206
      $region26: #{tpu_custom_call.1} parent=5 // pred_check_branch
        %209 = sbr.rel (%p207) target = $region28
      $region27: #{tpu_custom_call.1} parent=5 // pred_region
        // Predicated region
        $region29: #{tpu_custom_call.1} parent=27 // pred_check
          %p210 = pneg %p88
        $region30: #{tpu_custom_call.1} parent=27 // pred_check_branch
          %212 = sbr.rel (%p210) target = $region32
        $region31: #{tpu_custom_call.1} parent=27 // pred_region
          %s213 = sand.u32 %s14, 1
          %s214 = scalar_lea.sflag [#allocation4], %s213
          %s215 = sand.u32 %s78, 1
          %s216 = smul.addr %s215, 128
          %s217 = scalar_lea.vmem [#allocation8], %s216
          %s219 = ssub.s32 2048, 2048
          %220 = vsyncadd %s214, %s219
          %s221 = smul.addr %s21, 32
          %s222 = smul.addr %s221, 64
          %s223 = scalar_lea.hbm %s2, %s222
          %s224 = sshll.u32 %s217, 4
          %s225 = int_to_ptr.vmem [resolvable:$true] %s224
          %230 = dma.hbm_to_vmem [thread:$0]  %s223, 2048, %s225, %s214, 64, 64, 4
        $region32: #{tpu_custom_call.1} parent=27 // pred_fallthru
          _
        // Predicated region
        $region33: #{tpu_custom_call.1} parent=27 // pred_check
          %p231 = pneg %p114
        $region34: #{tpu_custom_call.1} parent=27 // pred_check_branch
          %233 = sbr.rel (%p231) target = $region36
        $region35: #{tpu_custom_call.1} parent=27 // pred_region
          %p234 = scmp.lt.s32.totalorder %s21, 2
          %s235 = scalar_select %p234, %s21, 2
          %s236 = scalar_lea.vmem %s3, %s235
        $region36: #{tpu_custom_call.1} parent=27 // pred_fallthru
          _
      $region28: #{tpu_custom_call.1} parent=5 // pred_fallthru
        _
      %p237 = scmp.le.s32.totalorder 1, %s14
      %p238 = scmp.lt.s32.totalorder %s14, 7
      %p239 = pnand %p237, %p238
      %p240 = pneg %p239
      // Predicated region
      $region37: #{tpu_custom_call.1} parent=5 // pred_check
        _
      $region38: #{tpu_custom_call.1} parent=5 // pred_check_branch
        %242 = sbr.rel (%p239) target = $region40
      $region39: #{tpu_custom_call.1} parent=5 // pred_region
        %s243 = ssub.s32 %s14, 1
        // Predicated region
        $region41: #{tpu_custom_call.1} parent=39 // pred_check
          %p244 = pneg %p47
        $region42: #{tpu_custom_call.1} parent=39 // pred_check_branch
          %246 = sbr.rel (%p244) target = $region44
        $region43: #{tpu_custom_call.1} parent=39 // pred_region
          %247 = dma.done [#allocation4], 4096
        $region44: #{tpu_custom_call.1} parent=39 // pred_fallthru
          _
        // Predicated region
        $region45: #{tpu_custom_call.1} parent=39 // pred_check
          %p248 = pneg %p68
        $region46: #{tpu_custom_call.1} parent=39 // pred_check_branch
          %250 = sbr.rel (%p248) target = $region48
        $region47: #{tpu_custom_call.1} parent=39 // pred_region
          %251 = dma.done [#allocation7], 2048
        $region48: #{tpu_custom_call.1} parent=39 // pred_fallthru
          _
        %s252 = sand.u32 %s19, 1
        %s253 = scalar_lea.sflag [#allocation4], %s252
        %s254 = sand.u32 %s81, 1
        %s255 = smul.addr %s254, 128
        %s256 = scalar_lea.vmem [#allocation8], %s255
        // Predicated region
        $region49: #{tpu_custom_call.1} parent=39 // pred_check
          %p257 = pneg %p94
        $region50: #{tpu_custom_call.1} parent=39 // pred_check_branch
          %259 = sbr.rel (%p257) target = $region52
        $region51: #{tpu_custom_call.1} parent=39 // pred_region
          %260 = dma.done %s253, 2048
        $region52: #{tpu_custom_call.1} parent=39 // pred_fallthru
          _
        %p261 = pneg %p47
        %p262 = pneg %p44
        %p263 = pneg %p68
        %p264 = pneg %p65
        %s265 = sand.u32 %s19, 1
        %s266 = scalar_lea.sflag [#allocation4], %s265
        %s267 = sand.u32 %s81, 1
        %s268 = smul.addr %s267, 128
        %s269 = scalar_lea.vmem [#allocation8], %s268
        %p270 = pneg %p94
        %p271 = pneg %p91
        %p272 = scmp.lt.s32.totalorder %s23, 2
        %s273 = scalar_select %p272, %s23, 2
        %s274 = scalar_lea.vmem %s3, %s273
        %p275 = pneg %p120
        %p276 = pneg %p117
        %p277 = pneg %p141
        %p278 = pneg %p138
        %p279 = pneg %p162
        %p280 = pneg %p159
        %p281 = scmp.lt.s32.totalorder %s23, 2
        %s282 = scalar_select %p281, %s23, 2
        %s283 = scalar_lea.vmem %s3, %s282
        %s285 = smul.u32 %s24, 128
        %p286 = scmp.eq.s32.totalorder %s23, 0
        %p287 = scmp.eq.s32.totalorder %s24, 0
        %p288 = pnand %p286, %p287
        %p289 = pneg %p288
        // Predicated region
        $region53: #{tpu_custom_call.1} parent=39 // pred_check
          _
        $region54: #{tpu_custom_call.1} parent=39 // pred_check_branch
          %291 = sbr.rel (%p288) target = $region56
        $region55: #{tpu_custom_call.1} parent=39 // pred_region
          %v292 = vld [vmem:[#allocation6] sm:$0xf]
          %v293 = vld [vmem:[#allocation6 + $0x4] sm:$0xf]
          %v294 = vld [vmem:[#allocation6 + $0x8] sm:$0xf]
          %v295 = vld [vmem:[#allocation6 + $0xc] sm:$0xf]
          %v296 = vld [vmem:[#allocation6 + $0x10] sm:$0xf]
          %v297 = vld [vmem:[#allocation6 + $0x14] sm:$0xf]
          %v298 = vld [vmem:[#allocation6 + $0x18] sm:$0xf]
          %v299 = vld [vmem:[#allocation6 + $0x1c] sm:$0xf]
          %v300 = vld [vmem:[#allocation6 + $0x20] sm:$0xf]
          %v301 = vld [vmem:[#allocation6 + $0x24] sm:$0xf]
          %v302 = vld [vmem:[#allocation6 + $0x28] sm:$0xf]
          %v303 = vld [vmem:[#allocation6 + $0x2c] sm:$0xf]
          %v304 = vld [vmem:[#allocation6 + $0x30] sm:$0xf]
          %v305 = vld [vmem:[#allocation6 + $0x34] sm:$0xf]
          %v306 = vld [vmem:[#allocation6 + $0x38] sm:$0xf]
          %v307 = vld [vmem:[#allocation6 + $0x3c] sm:$0xf]
          %v308 = vld [vmem:[#allocation6 + $0x40] sm:$0xf]
          %v309 = vld [vmem:[#allocation6 + $0x44] sm:$0xf]
          %v310 = vld [vmem:[#allocation6 + $0x48] sm:$0xf]
          %v311 = vld [vmem:[#allocation6 + $0x4c] sm:$0xf]
          %v312 = vld [vmem:[#allocation6 + $0x50] sm:$0xf]
          %v313 = vld [vmem:[#allocation6 + $0x54] sm:$0xf]
          %v314 = vld [vmem:[#allocation6 + $0x58] sm:$0xf]
          %v315 = vld [vmem:[#allocation6 + $0x5c] sm:$0xf]
          %v316 = vld [vmem:[#allocation6 + $0x60] sm:$0xf]
          %v317 = vld [vmem:[#allocation6 + $0x64] sm:$0xf]
          %v318 = vld [vmem:[#allocation6 + $0x68] sm:$0xf]
          %v319 = vld [vmem:[#allocation6 + $0x6c] sm:$0xf]
          %v320 = vld [vmem:[#allocation6 + $0x70] sm:$0xf]
          %v321 = vld [vmem:[#allocation6 + $0x74] sm:$0xf]
          %v322 = vld [vmem:[#allocation6 + $0x78] sm:$0xf]
          %v323 = vld [vmem:[#allocation6 + $0x7c] sm:$0xf]
          %324 = vst [vmem:[#allocation2] sm:$0xf] %v292
          %325 = vst [vmem:[#allocation2 + $0x4] sm:$0xf] %v293
          %326 = vst [vmem:[#allocation2 + $0x8] sm:$0xf] %v294
          %327 = vst [vmem:[#allocation2 + $0xc] sm:$0xf] %v295
          %328 = vst [vmem:[#allocation2 + $0x10] sm:$0xf] %v296
          %329 = vst [vmem:[#allocation2 + $0x14] sm:$0xf] %v297
          %330 = vst [vmem:[#allocation2 + $0x18] sm:$0xf] %v298
          %331 = vst [vmem:[#allocation2 + $0x1c] sm:$0xf] %v299
          %332 = vst [vmem:[#allocation2 + $0x20] sm:$0xf] %v300
          %333 = vst [vmem:[#allocation2 + $0x24] sm:$0xf] %v301
          %334 = vst [vmem:[#allocation2 + $0x28] sm:$0xf] %v302
          %335 = vst [vmem:[#allocation2 + $0x2c] sm:$0xf] %v303
          %336 = vst [vmem:[#allocation2 + $0x30] sm:$0xf] %v304
          %337 = vst [vmem:[#allocation2 + $0x34] sm:$0xf] %v305
          %338 = vst [vmem:[#allocation2 + $0x38] sm:$0xf] %v306
          %339 = vst [vmem:[#allocation2 + $0x3c] sm:$0xf] %v307
          %340 = vst [vmem:[#allocation2 + $0x40] sm:$0xf] %v308
          %341 = vst [vmem:[#allocation2 + $0x44] sm:$0xf] %v309
          %342 = vst [vmem:[#allocation2 + $0x48] sm:$0xf] %v310
          %343 = vst [vmem:[#allocation2 + $0x4c] sm:$0xf] %v311
          %344 = vst [vmem:[#allocation2 + $0x50] sm:$0xf] %v312
          %345 = vst [vmem:[#allocation2 + $0x54] sm:$0xf] %v313
          %346 = vst [vmem:[#allocation2 + $0x58] sm:$0xf] %v314
          %347 = vst [vmem:[#allocation2 + $0x5c] sm:$0xf] %v315
          %348 = vst [vmem:[#allocation2 + $0x60] sm:$0xf] %v316
          %349 = vst [vmem:[#allocation2 + $0x64] sm:$0xf] %v317
          %350 = vst [vmem:[#allocation2 + $0x68] sm:$0xf] %v318
          %351 = vst [vmem:[#allocation2 + $0x6c] sm:$0xf] %v319
          %352 = vst [vmem:[#allocation2 + $0x70] sm:$0xf] %v320
          %353 = vst [vmem:[#allocation2 + $0x74] sm:$0xf] %v321
          %354 = vst [vmem:[#allocation2 + $0x78] sm:$0xf] %v322
          %355 = vst [vmem:[#allocation2 + $0x7c] sm:$0xf] %v323
        $region56: #{tpu_custom_call.1} parent=39 // pred_fallthru
          _
        %p356 = scmp.lt.s32.totalorder %s23, 0
        %s357 = ssub.s32 0, %s23
        %s358 = scalar_select %p356, %s357, %s23
        %s359 = sand.u32 %s358, 1
        %s360 = ssub.s32 0, %s359
        %s361 = scalar_select %p356, %s360, %s359
        %p362 = scmp.ne.s32.totalorder %s361, 0
        %p363 = scmp.lt.s32.totalorder %s361, 0
        %p364 = pnand %p363, %p362
        %p365 = pneg %p364
        %s366 = sadd.s32 %s361, 2
        %s367 = scalar_select %p365, %s366, %s361
        %s368 = ssub.s32 1, %s367
        %s369 = sshra.s32 %s285, 3
        %s370 = sand.u32 %s285, 7
        %s371 = smul.u32 %s369, 2
        %s372 = smul.addr %s371, 4
        %s373 = scalar_lea.vmem [#allocation3], %s372
        %v374 = vld [vmem:[%s373] sm:$0xff]
        %v375 = vld [vmem:[%s373 + $0x8] sm:$0xff]
        %v376 = vld [vmem:[%s373 + $0x10] sm:$0xff]
        %v377 = vld [vmem:[%s373 + $0x18] sm:$0xff]
        %v378 = vld [vmem:[%s373 + $0x20] sm:$0xff]
        %v379 = vld [vmem:[%s373 + $0x28] sm:$0xff]
        %v380 = vld [vmem:[%s373 + $0x30] sm:$0xff]
        %v381 = vld [vmem:[%s373 + $0x38] sm:$0xff]
        %v382 = vld [vmem:[%s373 + $0x40] sm:$0xff]
        %v383 = vld [vmem:[%s373 + $0x48] sm:$0xff]
        %v384 = vld [vmem:[%s373 + $0x50] sm:$0xff]
        %v385 = vld [vmem:[%s373 + $0x58] sm:$0xff]
        %v386 = vld [vmem:[%s373 + $0x60] sm:$0xff]
        %v387 = vld [vmem:[%s373 + $0x68] sm:$0xff]
        %v388 = vld [vmem:[%s373 + $0x70] sm:$0xff]
        %v389 = vld [vmem:[%s373 + $0x78] sm:$0xff]
        %s390 = smul.u32 %s367, 32
        %s391 = smul.addr %s390, 4
        %s392 = scalar_lea.vmem [#allocation2], %s391
        %v393 = vld [vmem:[%s392] sm:$0xf]
        %v394 = vld [vmem:[%s392 + $0x4] sm:$0xf]
        %v395 = vld [vmem:[%s392 + $0x8] sm:$0xf]
        %v396 = vld [vmem:[%s392 + $0xc] sm:$0xf]
        %v397 = vld [vmem:[%s392 + $0x10] sm:$0xf]
        %v398 = vld [vmem:[%s392 + $0x14] sm:$0xf]
        %v399 = vld [vmem:[%s392 + $0x18] sm:$0xf]
        %v400 = vld [vmem:[%s392 + $0x1c] sm:$0xf]
        %v401 = vld [vmem:[%s392 + $0x20] sm:$0xf]
        %v402 = vld [vmem:[%s392 + $0x24] sm:$0xf]
        %v403 = vld [vmem:[%s392 + $0x28] sm:$0xf]
        %v404 = vld [vmem:[%s392 + $0x2c] sm:$0xf]
        %v405 = vld [vmem:[%s392 + $0x30] sm:$0xf]
        %v406 = vld [vmem:[%s392 + $0x34] sm:$0xf]
        %v407 = vld [vmem:[%s392 + $0x38] sm:$0xf]
        %v408 = vld [vmem:[%s392 + $0x3c] sm:$0xf]
        %v409 = vld [vmem:[%s392 + $0x40] sm:$0xf]
        %v410 = vld [vmem:[%s392 + $0x44] sm:$0xf]
        %v411 = vld [vmem:[%s392 + $0x48] sm:$0xf]
        %v412 = vld [vmem:[%s392 + $0x4c] sm:$0xf]
        %v413 = vld [vmem:[%s392 + $0x50] sm:$0xf]
        %v414 = vld [vmem:[%s392 + $0x54] sm:$0xf]
        %v415 = vld [vmem:[%s392 + $0x58] sm:$0xf]
        %v416 = vld [vmem:[%s392 + $0x5c] sm:$0xf]
        %v417 = vld [vmem:[%s392 + $0x60] sm:$0xf]
        %v418 = vld [vmem:[%s392 + $0x64] sm:$0xf]
        %v419 = vld [vmem:[%s392 + $0x68] sm:$0xf]
        %v420 = vld [vmem:[%s392 + $0x6c] sm:$0xf]
        %v421 = vld [vmem:[%s392 + $0x70] sm:$0xf]
        %v422 = vld [vmem:[%s392 + $0x74] sm:$0xf]
        %v423 = vld [vmem:[%s392 + $0x78] sm:$0xf]
        %v424 = vld [vmem:[%s392 + $0x7c] sm:$0xf]
        %v441 = vunpack.c.l.b16 %v374
        %v442 = vunpack.c.h.b16 %v374
        %v443 = vunpack.c.l.b16 %v375
        %v444 = vunpack.c.h.b16 %v375
        %v445 = vunpack.c.l.b16 %v376
        %v446 = vunpack.c.h.b16 %v376
        %v447 = vunpack.c.l.b16 %v377
        %v448 = vunpack.c.h.b16 %v377
        %v449 = vunpack.c.l.b16 %v378
        %v450 = vunpack.c.h.b16 %v378
        %v451 = vunpack.c.l.b16 %v379
        %v452 = vunpack.c.h.b16 %v379
        %v453 = vunpack.c.l.b16 %v380
        %v454 = vunpack.c.h.b16 %v380
        %v455 = vunpack.c.l.b16 %v381
        %v456 = vunpack.c.h.b16 %v381
        %v457 = vunpack.c.l.b16 %v382
        %v458 = vunpack.c.h.b16 %v382
        %v459 = vunpack.c.l.b16 %v383
        %v460 = vunpack.c.h.b16 %v383
        %v461 = vunpack.c.l.b16 %v384
        %v462 = vunpack.c.h.b16 %v384
        %v463 = vunpack.c.l.b16 %v385
        %v464 = vunpack.c.h.b16 %v385
        %v465 = vunpack.c.l.b16 %v386
        %v466 = vunpack.c.h.b16 %v386
        %v467 = vunpack.c.l.b16 %v387
        %v468 = vunpack.c.h.b16 %v387
        %v469 = vunpack.c.l.b16 %v388
        %v470 = vunpack.c.h.b16 %v388
        %v471 = vunpack.c.l.b16 %v389
        %v472 = vunpack.c.h.b16 %v389
        %v473 = vpack.c.b16 %v443, %v441
        %v474 = vpack.c.b16 %v444, %v442
        %v475 = vpack.c.b16 %v447, %v445
        %v476 = vpack.c.b16 %v448, %v446
        %v477 = vpack.c.b16 %v451, %v449
        %v478 = vpack.c.b16 %v452, %v450
        %v479 = vpack.c.b16 %v455, %v453
        %v480 = vpack.c.b16 %v456, %v454
        %v481 = vpack.c.b16 %v459, %v457
        %v482 = vpack.c.b16 %v460, %v458
        %v483 = vpack.c.b16 %v463, %v461
        %v484 = vpack.c.b16 %v464, %v462
        %v485 = vpack.c.b16 %v467, %v465
        %v486 = vpack.c.b16 %v468, %v466
        %v487 = vpack.c.b16 %v471, %v469
        %v488 = vpack.c.b16 %v472, %v470
        %v537 = vunpack.c.l.b16 %v393
        %v538 = vunpack.c.l.b16 %v394
        %v539 = vunpack.c.l.b16 %v395
        %v540 = vunpack.c.l.b16 %v396
        %v541 = vunpack.c.l.b16 %v397
        %v542 = vunpack.c.l.b16 %v398
        %v543 = vunpack.c.l.b16 %v399
        %v544 = vunpack.c.l.b16 %v400
        %v545 = vunpack.c.l.b16 %v401
        %v546 = vunpack.c.l.b16 %v402
        %v547 = vunpack.c.l.b16 %v403
        %v548 = vunpack.c.l.b16 %v404
        %v549 = vunpack.c.l.b16 %v405
        %v550 = vunpack.c.l.b16 %v406
        %v551 = vunpack.c.l.b16 %v407
        %v552 = vunpack.c.l.b16 %v408
        %v553 = vunpack.c.l.b16 %v409
        %v554 = vunpack.c.l.b16 %v410
        %v555 = vunpack.c.l.b16 %v411
        %v556 = vunpack.c.l.b16 %v412
        %v557 = vunpack.c.l.b16 %v413
        %v558 = vunpack.c.l.b16 %v414
        %v559 = vunpack.c.l.b16 %v415
        %v560 = vunpack.c.l.b16 %v416
        %v561 = vunpack.c.l.b16 %v417
        %v562 = vunpack.c.l.b16 %v418
        %v563 = vunpack.c.l.b16 %v419
        %v564 = vunpack.c.l.b16 %v420
        %v565 = vunpack.c.l.b16 %v421
        %v566 = vunpack.c.l.b16 %v422
        %v567 = vunpack.c.l.b16 %v423
        %v568 = vunpack.c.l.b16 %v424
        %v569 = vpack.c.b16 %v538, %v537
        %v570 = vpack.c.b16 %v540, %v539
        %v571 = vpack.c.b16 %v542, %v541
        %v572 = vpack.c.b16 %v544, %v543
        %v573 = vpack.c.b16 %v546, %v545
        %v574 = vpack.c.b16 %v548, %v547
        %v575 = vpack.c.b16 %v550, %v549
        %v576 = vpack.c.b16 %v552, %v551
        %v577 = vpack.c.b16 %v554, %v553
        %v578 = vpack.c.b16 %v556, %v555
        %v579 = vpack.c.b16 %v558, %v557
        %v580 = vpack.c.b16 %v560, %v559
        %v581 = vpack.c.b16 %v562, %v561
        %v582 = vpack.c.b16 %v564, %v563
        %v583 = vpack.c.b16 %v566, %v565
        %v584 = vpack.c.b16 %v568, %v567
        %601 = vmatprep.subr.bf16.mxu0 0
        %602 = vmatpush1.bf16.msra.mxu0 %v576
        %603 = vmatprep.subr.bf16.mxu0 0
        %604 = vmatpush1.bf16.msra.mxu0 %v575
        %605 = vmatprep.subr.bf16.mxu0 0
        %606 = vmatpush1.bf16.msra.mxu0 %v574
        %607 = vmatprep.subr.bf16.mxu0 0
        %608 = vmatpush1.bf16.msra.mxu0 %v573
        %609 = vmatprep.subr.bf16.mxu0 0
        %610 = vmatpush1.bf16.msra.mxu0 %v572
        %611 = vmatprep.subr.bf16.mxu0 0
        %612 = vmatpush1.bf16.msra.mxu0 %v571
        %613 = vmatprep.subr.bf16.mxu0 0
        %614 = vmatpush1.bf16.msra.mxu0 %v570
        %615 = vmatprep.subr.bf16.mxu0 0
        %616 = vmatpush1.bf16.msra.mxu0 %v569
        %617 = vmatprep.subr.bf16.mxu0 0
        %618 = vmatpush2.bf16.msra.mxu0 %v584
        %619 = vmatprep.subr.bf16.mxu0 0
        %620 = vmatpush2.bf16.msra.mxu0 %v583
        %621 = vmatprep.subr.bf16.mxu0 0
        %622 = vmatpush2.bf16.msra.mxu0 %v582
        %623 = vmatprep.subr.bf16.mxu0 0
        %624 = vmatpush2.bf16.msra.mxu0 %v581
        %625 = vmatprep.subr.bf16.mxu0 0
        %626 = vmatpush2.bf16.msra.mxu0 %v580
        %627 = vmatprep.subr.bf16.mxu0 0
        %628 = vmatpush2.bf16.msra.mxu0 %v579
        %629 = vmatprep.subr.bf16.mxu0 0
        %630 = vmatpush2.bf16.msra.mxu0 %v578
        %631 = vmatprep.subr.bf16.mxu0 0
        %632 = vmatpush2.bf16.msra.mxu0 %v577
        %633 = vmatprep.mubr.bf16.mxu0 %v474
        %634 = vmatmul.mubr.bf16.gmra.mxu0 %v473
        %v635 = vpop.f32.mrf.mxu0
        %v636 = vadd.f32 0.0, %v635
        %v637 = vpop.f32.mrf.mxu0
        %v638 = vpop.f32.mrf.mxu0
        %v639 = vadd.f32 0.0, %v638
        %v640 = vpop.f32.mrf.mxu0
        %641 = vmatprep.mubr.bf16.mxu0 %v476
        %642 = vmatmul.mubr.bf16.gmra.mxu0 %v475
        %v643 = vpop.f32.mrf.mxu0
        %v644 = vadd.f32 0.0, %v643
        %v645 = vpop.f32.mrf.mxu0
        %v646 = vpop.f32.mrf.mxu0
        %v647 = vadd.f32 0.0, %v646
        %v648 = vpop.f32.mrf.mxu0
        %649 = vmatprep.mubr.bf16.mxu0 %v478
        %650 = vmatmul.mubr.bf16.gmra.mxu0 %v477
        %v651 = vpop.f32.mrf.mxu0
        %v652 = vadd.f32 0.0, %v651
        %v653 = vpop.f32.mrf.mxu0
        %v654 = vpop.f32.mrf.mxu0
        %v655 = vadd.f32 0.0, %v654
        %v656 = vpop.f32.mrf.mxu0
        %657 = vmatprep.mubr.bf16.mxu0 %v480
        %658 = vmatmul.mubr.bf16.gmra.mxu0 %v479
        %v659 = vpop.f32.mrf.mxu0
        %v660 = vadd.f32 0.0, %v659
        %v661 = vpop.f32.mrf.mxu0
        %v662 = vpop.f32.mrf.mxu0
        %v663 = vadd.f32 0.0, %v662
        %v664 = vpop.f32.mrf.mxu0
        %665 = vmatprep.mubr.bf16.mxu0 %v482
        %666 = vmatmul.mubr.bf16.gmra.mxu0 %v481
        %v667 = vpop.f32.mrf.mxu0
        %v668 = vadd.f32 0.0, %v667
        %v669 = vpop.f32.mrf.mxu0
        %v670 = vpop.f32.mrf.mxu0
        %v671 = vadd.f32 0.0, %v670
        %v672 = vpop.f32.mrf.mxu0
        %673 = vmatprep.mubr.bf16.mxu0 %v484
        %674 = vmatmul.mubr.bf16.gmra.mxu0 %v483
        %v675 = vpop.f32.mrf.mxu0
        %v676 = vadd.f32 0.0, %v675
        %v677 = vpop.f32.mrf.mxu0
        %v678 = vpop.f32.mrf.mxu0
        %v679 = vadd.f32 0.0, %v678
        %v680 = vpop.f32.mrf.mxu0
        %681 = vmatprep.mubr.bf16.mxu0 %v486
        %682 = vmatmul.mubr.bf16.gmra.mxu0 %v485
        %v683 = vpop.f32.mrf.mxu0
        %v684 = vadd.f32 0.0, %v683
        %v685 = vpop.f32.mrf.mxu0
        %v686 = vpop.f32.mrf.mxu0
        %v687 = vadd.f32 0.0, %v686
        %v688 = vpop.f32.mrf.mxu0
        %689 = vmatprep.mubr.bf16.mxu0 %v488
        %690 = vmatmul.mubr.bf16.gmra.mxu0 %v487
        %v691 = vpop.f32.mrf.mxu0
        %v692 = vadd.f32 0.0, %v691
        %v693 = vpop.f32.mrf.mxu0
        %v694 = vpop.f32.mrf.mxu0
        %v695 = vadd.f32 0.0, %v694
        %v696 = vpop.f32.mrf.mxu0
        %697 = vdwg.mxu0
        %s698 = sadd.s32 %s369, %s390
        %s699 = smul.addr %s698, 4
        %s700 = scalar_lea.vmem [#allocation2], %s699
        %v701 = vld [vmem:[%s700] sm:$0xf]
        %v702 = vld [vmem:[%s700 + $0x4] sm:$0xf]
        %v703 = vld [vmem:[%s700 + $0x8] sm:$0xf]
        %v704 = vld [vmem:[%s700 + $0xc] sm:$0xf]
        %v705 = vld [vmem:[%s700 + $0x10] sm:$0xf]
        %v706 = vld [vmem:[%s700 + $0x14] sm:$0xf]
        %v707 = vld [vmem:[%s700 + $0x18] sm:$0xf]
        %v708 = vld [vmem:[%s700 + $0x1c] sm:$0xf]
        %v709 = vld [vmem:[%s700 + $0x20] sm:$0xf]
        %v710 = vld [vmem:[%s700 + $0x24] sm:$0xf]
        %v711 = vld [vmem:[%s700 + $0x28] sm:$0xf]
        %v712 = vld [vmem:[%s700 + $0x2c] sm:$0xf]
        %v713 = vld [vmem:[%s700 + $0x30] sm:$0xf]
        %v714 = vld [vmem:[%s700 + $0x34] sm:$0xf]
        %v715 = vld [vmem:[%s700 + $0x38] sm:$0xf]
        %v716 = vld [vmem:[%s700 + $0x3c] sm:$0xf]
        %v717 = vld [vmem:[%s256] sm:$0xf]
        %v718 = vld [vmem:[%s256 + $0x4] sm:$0xf]
        %v719 = vld [vmem:[%s256 + $0x8] sm:$0xf]
        %v720 = vld [vmem:[%s256 + $0xc] sm:$0xf]
        %v721 = vld [vmem:[%s256 + $0x10] sm:$0xf]
        %v722 = vld [vmem:[%s256 + $0x14] sm:$0xf]
        %v723 = vld [vmem:[%s256 + $0x18] sm:$0xf]
        %v724 = vld [vmem:[%s256 + $0x1c] sm:$0xf]
        %v725 = vld [vmem:[%s256 + $0x20] sm:$0xf]
        %v726 = vld [vmem:[%s256 + $0x24] sm:$0xf]
        %v727 = vld [vmem:[%s256 + $0x28] sm:$0xf]
        %v728 = vld [vmem:[%s256 + $0x2c] sm:$0xf]
        %v729 = vld [vmem:[%s256 + $0x30] sm:$0xf]
        %v730 = vld [vmem:[%s256 + $0x34] sm:$0xf]
        %v731 = vld [vmem:[%s256 + $0x38] sm:$0xf]
        %v732 = vld [vmem:[%s256 + $0x3c] sm:$0xf]
        %v733 = vpack.c.bf16 %v639, %v636
        %v734 = vpack.c.bf16 %v647, %v644
        %v735 = vpack.c.bf16 %v655, %v652
        %v736 = vpack.c.bf16 %v663, %v660
        %v737 = vpack.c.bf16 %v671, %v668
        %v738 = vpack.c.bf16 %v679, %v676
        %v739 = vpack.c.bf16 %v687, %v684
        %v740 = vpack.c.bf16 %v695, %v692
        %v741 = vld [vmem:[%s256 + $0x40] sm:$0xf]
        %v742 = vld [vmem:[%s256 + $0x44] sm:$0xf]
        %v743 = vld [vmem:[%s256 + $0x48] sm:$0xf]
        %v744 = vld [vmem:[%s256 + $0x4c] sm:$0xf]
        %v745 = vld [vmem:[%s256 + $0x50] sm:$0xf]
        %v746 = vld [vmem:[%s256 + $0x54] sm:$0xf]
        %v747 = vld [vmem:[%s256 + $0x58] sm:$0xf]
        %v748 = vld [vmem:[%s256 + $0x5c] sm:$0xf]
        %v749 = vld [vmem:[%s256 + $0x60] sm:$0xf]
        %v750 = vld [vmem:[%s256 + $0x64] sm:$0xf]
        %v751 = vld [vmem:[%s256 + $0x68] sm:$0xf]
        %v752 = vld [vmem:[%s256 + $0x6c] sm:$0xf]
        %v753 = vld [vmem:[%s256 + $0x70] sm:$0xf]
        %v754 = vld [vmem:[%s256 + $0x74] sm:$0xf]
        %v755 = vld [vmem:[%s256 + $0x78] sm:$0xf]
        %v756 = vld [vmem:[%s256 + $0x7c] sm:$0xf]
        %v773 = vunpack.c.l.b16 %v741
        %v774 = vunpack.c.l.b16 %v742
        %v775 = vunpack.c.l.b16 %v743
        %v776 = vunpack.c.l.b16 %v744
        %v777 = vunpack.c.l.b16 %v745
        %v778 = vunpack.c.l.b16 %v746
        %v779 = vunpack.c.l.b16 %v747
        %v780 = vunpack.c.l.b16 %v748
        %v781 = vunpack.c.l.b16 %v749
        %v782 = vunpack.c.l.b16 %v750
        %v783 = vunpack.c.l.b16 %v751
        %v784 = vunpack.c.l.b16 %v752
        %v785 = vunpack.c.l.b16 %v753
        %v786 = vunpack.c.l.b16 %v754
        %v787 = vunpack.c.l.b16 %v755
        %v788 = vunpack.c.l.b16 %v756
        %v789 = vpack.c.b16 %v774, %v773
        %v790 = vpack.c.b16 %v776, %v775
        %v791 = vpack.c.b16 %v778, %v777
        %v792 = vpack.c.b16 %v780, %v779
        %v793 = vpack.c.b16 %v782, %v781
        %v794 = vpack.c.b16 %v784, %v783
        %v795 = vpack.c.b16 %v786, %v785
        %v796 = vpack.c.b16 %v788, %v787
        %805 = vmatprep.subr.bf16.mxu0 0
        %806 = vmatpush1.bf16.msra.mxu0 %v796
        %807 = vmatprep.subr.bf16.mxu0 0
        %808 = vmatpush1.bf16.msra.mxu0 %v795
        %809 = vmatprep.subr.bf16.mxu0 0
        %810 = vmatpush1.bf16.msra.mxu0 %v794
        %811 = vmatprep.subr.bf16.mxu0 0
        %812 = vmatpush1.bf16.msra.mxu0 %v793
        %813 = vmatprep.subr.bf16.mxu0 0
        %814 = vmatpush1.bf16.msra.mxu0 %v792
        %815 = vmatprep.subr.bf16.mxu0 0
        %816 = vmatpush1.bf16.msra.mxu0 %v791
        %817 = vmatprep.subr.bf16.mxu0 0
        %818 = vmatpush1.bf16.msra.mxu0 %v790
        %819 = vmatprep.subr.bf16.mxu0 0
        %820 = vmatpush1.bf16.msra.mxu0 %v789
        %821 = vmatprep.subr.bf16.mxu0 0
        %822 = vmatpush2.bf16.msra.mxu0 0
        %823 = vmatprep.subr.bf16.mxu0 0
        %824 = vmatpush2.bf16.msra.mxu0 0
        %825 = vmatprep.subr.bf16.mxu0 0
        %826 = vmatpush2.bf16.msra.mxu0 0
        %827 = vmatprep.subr.bf16.mxu0 0
        %828 = vmatpush2.bf16.msra.mxu0 0
        %829 = vmatprep.subr.bf16.mxu0 0
        %830 = vmatpush2.bf16.msra.mxu0 0
        %831 = vmatprep.subr.bf16.mxu0 0
        %832 = vmatpush2.bf16.msra.mxu0 0
        %833 = vmatprep.subr.bf16.mxu0 0
        %834 = vmatpush2.bf16.msra.mxu0 0
        %835 = vmatprep.subr.bf16.mxu0 0
        %836 = vmatpush2.bf16.msra.mxu0 0
        %837 = vmatprep.mubr.bf16.mxu0 0
        %838 = vmatmul.mubr.bf16.gmra.mxu0 %v733
        %v839 = vpop.f32.mrf.mxu0
        %v840 = vadd.f32 0.0, %v839
        %v841 = vpop.f32.mrf.mxu0
        %v842 = vpop.f32.mrf.mxu0
        %v843 = vadd.f32 0.0, %v842
        %v844 = vpop.f32.mrf.mxu0
        %845 = vmatprep.mubr.bf16.mxu0 0
        %846 = vmatmul.mubr.bf16.gmra.mxu0 %v734
        %v847 = vpop.f32.mrf.mxu0
        %v848 = vadd.f32 0.0, %v847
        %v849 = vpop.f32.mrf.mxu0
        %v850 = vpop.f32.mrf.mxu0
        %v851 = vadd.f32 0.0, %v850
        %v852 = vpop.f32.mrf.mxu0
        %853 = vmatprep.mubr.bf16.mxu0 0
        %854 = vmatmul.mubr.bf16.gmra.mxu0 %v735
        %v855 = vpop.f32.mrf.mxu0
        %v856 = vadd.f32 0.0, %v855
        %v857 = vpop.f32.mrf.mxu0
        %v858 = vpop.f32.mrf.mxu0
        %v859 = vadd.f32 0.0, %v858
        %v860 = vpop.f32.mrf.mxu0
        %861 = vmatprep.mubr.bf16.mxu0 0
        %862 = vmatmul.mubr.bf16.gmra.mxu0 %v736
        %v863 = vpop.f32.mrf.mxu0
        %v864 = vadd.f32 0.0, %v863
        %v865 = vpop.f32.mrf.mxu0
        %v866 = vpop.f32.mrf.mxu0
        %v867 = vadd.f32 0.0, %v866
        %v868 = vpop.f32.mrf.mxu0
        %869 = vmatprep.mubr.bf16.mxu0 0
        %870 = vmatmul.mubr.bf16.gmra.mxu0 %v737
        %v871 = vpop.f32.mrf.mxu0
        %v872 = vadd.f32 0.0, %v871
        %v873 = vpop.f32.mrf.mxu0
        %v874 = vpop.f32.mrf.mxu0
        %v875 = vadd.f32 0.0, %v874
        %v876 = vpop.f32.mrf.mxu0
        %877 = vmatprep.mubr.bf16.mxu0 0
        %878 = vmatmul.mubr.bf16.gmra.mxu0 %v738
        %v879 = vpop.f32.mrf.mxu0
        %v880 = vadd.f32 0.0, %v879
        %v881 = vpop.f32.mrf.mxu0
        %v882 = vpop.f32.mrf.mxu0
        %v883 = vadd.f32 0.0, %v882
        %v884 = vpop.f32.mrf.mxu0
        %885 = vmatprep.mubr.bf16.mxu0 0
        %886 = vmatmul.mubr.bf16.gmra.mxu0 %v739
        %v887 = vpop.f32.mrf.mxu0
        %v888 = vadd.f32 0.0, %v887
        %v889 = vpop.f32.mrf.mxu0
        %v890 = vpop.f32.mrf.mxu0
        %v891 = vadd.f32 0.0, %v890
        %v892 = vpop.f32.mrf.mxu0
        %893 = vmatprep.mubr.bf16.mxu0 0
        %894 = vmatmul.mubr.bf16.gmra.mxu0 %v740
        %v895 = vpop.f32.mrf.mxu0
        %v896 = vadd.f32 0.0, %v895
        %v897 = vpop.f32.mrf.mxu0
        %v898 = vpop.f32.mrf.mxu0
        %v899 = vadd.f32 0.0, %v898
        %v900 = vpop.f32.mrf.mxu0
        %901 = vdwg.mxu0
        %v918 = vunpack.c.l.b16 %v701
        %v919 = vunpack.c.l.b16 %v702
        %v920 = vunpack.c.l.b16 %v703
        %v921 = vunpack.c.l.b16 %v704
        %v922 = vunpack.c.l.b16 %v705
        %v923 = vunpack.c.l.b16 %v706
        %v924 = vunpack.c.l.b16 %v707
        %v925 = vunpack.c.l.b16 %v708
        %v926 = vunpack.c.l.b16 %v709
        %v927 = vunpack.c.l.b16 %v710
        %v928 = vunpack.c.l.b16 %v711
        %v929 = vunpack.c.l.b16 %v712
        %v930 = vunpack.c.l.b16 %v713
        %v931 = vunpack.c.l.b16 %v714
        %v932 = vunpack.c.l.b16 %v715
        %v933 = vunpack.c.l.b16 %v716
        %v934 = vpack.c.b16 %v919, %v918
        %v935 = vpack.c.b16 %v921, %v920
        %v936 = vpack.c.b16 %v923, %v922
        %v937 = vpack.c.b16 %v925, %v924
        %v938 = vpack.c.b16 %v927, %v926
        %v939 = vpack.c.b16 %v929, %v928
        %v940 = vpack.c.b16 %v931, %v930
        %v941 = vpack.c.b16 %v933, %v932
        %v966 = vunpack.c.l.b16 %v717
        %v967 = vunpack.c.l.b16 %v718
        %v968 = vunpack.c.l.b16 %v719
        %v969 = vunpack.c.l.b16 %v720
        %v970 = vunpack.c.l.b16 %v721
        %v971 = vunpack.c.l.b16 %v722
        %v972 = vunpack.c.l.b16 %v723
        %v973 = vunpack.c.l.b16 %v724
        %v974 = vunpack.c.l.b16 %v725
        %v975 = vunpack.c.l.b16 %v726
        %v976 = vunpack.c.l.b16 %v727
        %v977 = vunpack.c.l.b16 %v728
        %v978 = vunpack.c.l.b16 %v729
        %v979 = vunpack.c.l.b16 %v730
        %v980 = vunpack.c.l.b16 %v731
        %v981 = vunpack.c.l.b16 %v732
        %v982 = vpack.c.b16 %v967, %v966
        %v983 = vpack.c.b16 %v969, %v968
        %v984 = vpack.c.b16 %v971, %v970
        %v985 = vpack.c.b16 %v973, %v972
        %v986 = vpack.c.b16 %v975, %v974
        %v987 = vpack.c.b16 %v977, %v976
        %v988 = vpack.c.b16 %v979, %v978
        %v989 = vpack.c.b16 %v981, %v980
        %998 = vmatprep.subr.bf16.mxu0 0
        %999 = vmatpush1.bf16.msra.mxu0 %v989
        %1000 = vmatprep.subr.bf16.mxu0 0
        %1001 = vmatpush1.bf16.msra.mxu0 %v988
        %1002 = vmatprep.subr.bf16.mxu0 0
        %1003 = vmatpush1.bf16.msra.mxu0 %v987
        %1004 = vmatprep.subr.bf16.mxu0 0
        %1005 = vmatpush1.bf16.msra.mxu0 %v986
        %1006 = vmatprep.subr.bf16.mxu0 0
        %1007 = vmatpush1.bf16.msra.mxu0 %v985
        %1008 = vmatprep.subr.bf16.mxu0 0
        %1009 = vmatpush1.bf16.msra.mxu0 %v984
        %1010 = vmatprep.subr.bf16.mxu0 0
        %1011 = vmatpush1.bf16.msra.mxu0 %v983
        %1012 = vmatprep.subr.bf16.mxu0 0
        %1013 = vmatpush1.bf16.msra.mxu0 %v982
        %1014 = vmatprep.subr.bf16.mxu0 0
        %1015 = vmatpush2.bf16.msra.mxu0 0
        %1016 = vmatprep.subr.bf16.mxu0 0
        %1017 = vmatpush2.bf16.msra.mxu0 0
        %1018 = vmatprep.subr.bf16.mxu0 0
        %1019 = vmatpush2.bf16.msra.mxu0 0
        %1020 = vmatprep.subr.bf16.mxu0 0
        %1021 = vmatpush2.bf16.msra.mxu0 0
        %1022 = vmatprep.subr.bf16.mxu0 0
        %1023 = vmatpush2.bf16.msra.mxu0 0
        %1024 = vmatprep.subr.bf16.mxu0 0
        %1025 = vmatpush2.bf16.msra.mxu0 0
        %1026 = vmatprep.subr.bf16.mxu0 0
        %1027 = vmatpush2.bf16.msra.mxu0 0
        %1028 = vmatprep.subr.bf16.mxu0 0
        %1029 = vmatpush2.bf16.msra.mxu0 0
        %1030 = vmatprep.mubr.bf16.mxu0 0
        %1031 = vmatmul.mubr.bf16.gmra.mxu0 %v934
        %v1032 = vpop.f32.mrf.mxu0
        %v1033 = vadd.f32 %v840, %v1032
        %v1034 = vpop.f32.mrf.mxu0
        %v1035 = vpop.f32.mrf.mxu0
        %v1036 = vadd.f32 %v843, %v1035
        %v1037 = vpop.f32.mrf.mxu0
        %1038 = vmatprep.mubr.bf16.mxu0 0
        %1039 = vmatmul.mubr.bf16.gmra.mxu0 %v935
        %v1040 = vpop.f32.mrf.mxu0
        %v1041 = vadd.f32 %v848, %v1040
        %v1042 = vpop.f32.mrf.mxu0
        %v1043 = vpop.f32.mrf.mxu0
        %v1044 = vadd.f32 %v851, %v1043
        %v1045 = vpop.f32.mrf.mxu0
        %1046 = vmatprep.mubr.bf16.mxu0 0
        %1047 = vmatmul.mubr.bf16.gmra.mxu0 %v936
        %v1048 = vpop.f32.mrf.mxu0
        %v1049 = vadd.f32 %v856, %v1048
        %v1050 = vpop.f32.mrf.mxu0
        %v1051 = vpop.f32.mrf.mxu0
        %v1052 = vadd.f32 %v859, %v1051
        %v1053 = vpop.f32.mrf.mxu0
        %1054 = vmatprep.mubr.bf16.mxu0 0
        %1055 = vmatmul.mubr.bf16.gmra.mxu0 %v937
        %v1056 = vpop.f32.mrf.mxu0
        %v1057 = vadd.f32 %v864, %v1056
        %v1058 = vpop.f32.mrf.mxu0
        %v1059 = vpop.f32.mrf.mxu0
        %v1060 = vadd.f32 %v867, %v1059
        %v1061 = vpop.f32.mrf.mxu0
        %1062 = vmatprep.mubr.bf16.mxu0 0
        %1063 = vmatmul.mubr.bf16.gmra.mxu0 %v938
        %v1064 = vpop.f32.mrf.mxu0
        %v1065 = vadd.f32 %v872, %v1064
        %v1066 = vpop.f32.mrf.mxu0
        %v1067 = vpop.f32.mrf.mxu0
        %v1068 = vadd.f32 %v875, %v1067
        %v1069 = vpop.f32.mrf.mxu0
        %1070 = vmatprep.mubr.bf16.mxu0 0
        %1071 = vmatmul.mubr.bf16.gmra.mxu0 %v939
        %v1072 = vpop.f32.mrf.mxu0
        %v1073 = vadd.f32 %v880, %v1072
        %v1074 = vpop.f32.mrf.mxu0
        %v1075 = vpop.f32.mrf.mxu0
        %v1076 = vadd.f32 %v883, %v1075
        %v1077 = vpop.f32.mrf.mxu0
        %1078 = vmatprep.mubr.bf16.mxu0 0
        %1079 = vmatmul.mubr.bf16.gmra.mxu0 %v940
        %v1080 = vpop.f32.mrf.mxu0
        %v1081 = vadd.f32 %v888, %v1080
        %v1082 = vpop.f32.mrf.mxu0
        %v1083 = vpop.f32.mrf.mxu0
        %v1084 = vadd.f32 %v891, %v1083
        %v1085 = vpop.f32.mrf.mxu0
        %1086 = vmatprep.mubr.bf16.mxu0 0
        %1087 = vmatmul.mubr.bf16.gmra.mxu0 %v941
        %v1088 = vpop.f32.mrf.mxu0
        %v1089 = vadd.f32 %v896, %v1088
        %v1090 = vpop.f32.mrf.mxu0
        %v1091 = vpop.f32.mrf.mxu0
        %v1092 = vadd.f32 %v899, %v1091
        %v1093 = vpop.f32.mrf.mxu0
        %1094 = vdwg.mxu0
        %v1095 = vld [vmem:[%s283] sm:$0x1]
        %v1097 = vlaneseq
        %v1098 = vshrl.u32 %v1097, 7
        %v1099 = vsub.s32 0, %v1098
        %v1100 = vrot.slane %v1095, %v1099
        %v1102 = vadd.f32 %v1033, %v1100
        %v1103 = vadd.f32 %v1036, %v1100
        %v1104 = vadd.f32 %v1041, %v1100
        %v1105 = vadd.f32 %v1044, %v1100
        %v1106 = vadd.f32 %v1049, %v1100
        %v1107 = vadd.f32 %v1052, %v1100
        %v1108 = vadd.f32 %v1057, %v1100
        %v1109 = vadd.f32 %v1060, %v1100
        %v1110 = vadd.f32 %v1065, %v1100
        %v1111 = vadd.f32 %v1068, %v1100
        %v1112 = vadd.f32 %v1073, %v1100
        %v1113 = vadd.f32 %v1076, %v1100
        %v1114 = vadd.f32 %v1081, %v1100
        %v1115 = vadd.f32 %v1084, %v1100
        %v1116 = vadd.f32 %v1089, %v1100
        %v1117 = vadd.f32 %v1092, %v1100
        %p1118 = scmp.eq.s32.totalorder %s23, 2
        %p1119 = scmp.ne.s32.totalorder %s23, 2
        // Predicated region
        $region57: #{tpu_custom_call.1} parent=39 // pred_check
          %p1120 = pneg %p1119
        $region58: #{tpu_custom_call.1} parent=39 // pred_check_branch
          %1122 = sbr.rel (%p1120) target = $region60
        $region59: #{tpu_custom_call.1} parent=39 // pred_region
          %vm1123 = vcmp.gt.f32.partialorder %v1102, 0.0
          %vm1124 = vcmp.gt.f32.partialorder %v1103, 0.0
          %vm1125 = vcmp.gt.f32.partialorder %v1104, 0.0
          %vm1126 = vcmp.gt.f32.partialorder %v1105, 0.0
          %vm1127 = vcmp.gt.f32.partialorder %v1106, 0.0
          %vm1128 = vcmp.gt.f32.partialorder %v1107, 0.0
          %vm1129 = vcmp.gt.f32.partialorder %v1108, 0.0
          %vm1130 = vcmp.gt.f32.partialorder %v1109, 0.0
          %vm1131 = vcmp.gt.f32.partialorder %v1110, 0.0
          %vm1132 = vcmp.gt.f32.partialorder %v1111, 0.0
          %vm1133 = vcmp.gt.f32.partialorder %v1112, 0.0
          %vm1134 = vcmp.gt.f32.partialorder %v1113, 0.0
          %vm1135 = vcmp.gt.f32.partialorder %v1114, 0.0
          %vm1136 = vcmp.gt.f32.partialorder %v1115, 0.0
          %vm1137 = vcmp.gt.f32.partialorder %v1116, 0.0
          %vm1138 = vcmp.gt.f32.partialorder %v1117, 0.0
          %v1139 = vmul.f32 %v1102, 1.442695
          %v1140 = vpow.pop %v1139
          %v1141 = vmul.f32 %v1103, 1.442695
          %v1142 = vpow.pop %v1141
          %v1143 = vmul.f32 %v1104, 1.442695
          %v1144 = vpow.pop %v1143
          %v1145 = vmul.f32 %v1105, 1.442695
          %v1146 = vpow.pop %v1145
          %v1147 = vmul.f32 %v1106, 1.442695
          %v1148 = vpow.pop %v1147
          %v1149 = vmul.f32 %v1107, 1.442695
          %v1150 = vpow.pop %v1149
          %v1151 = vmul.f32 %v1108, 1.442695
          %v1152 = vpow.pop %v1151
          %v1153 = vmul.f32 %v1109, 1.442695
          %v1154 = vpow.pop %v1153
          %v1155 = vmul.f32 %v1110, 1.442695
          %v1156 = vpow.pop %v1155
          %v1157 = vmul.f32 %v1111, 1.442695
          %v1158 = vpow.pop %v1157
          %v1159 = vmul.f32 %v1112, 1.442695
          %v1160 = vpow.pop %v1159
          %v1161 = vmul.f32 %v1113, 1.442695
          %v1162 = vpow.pop %v1161
          %v1163 = vmul.f32 %v1114, 1.442695
          %v1164 = vpow.pop %v1163
          %v1165 = vmul.f32 %v1115, 1.442695
          %v1166 = vpow.pop %v1165
          %v1167 = vmul.f32 %v1116, 1.442695
          %v1168 = vpow.pop %v1167
          %v1169 = vmul.f32 %v1117, 1.442695
          %v1170 = vpow.pop %v1169
          %v1171 = vsub.f32 %v1140, 1.0
          %v1172 = vsub.f32 %v1142, 1.0
          %v1173 = vsub.f32 %v1144, 1.0
          %v1174 = vsub.f32 %v1146, 1.0
          %v1175 = vsub.f32 %v1148, 1.0
          %v1176 = vsub.f32 %v1150, 1.0
          %v1177 = vsub.f32 %v1152, 1.0
          %v1178 = vsub.f32 %v1154, 1.0
          %v1179 = vsub.f32 %v1156, 1.0
          %v1180 = vsub.f32 %v1158, 1.0
          %v1181 = vsub.f32 %v1160, 1.0
          %v1182 = vsub.f32 %v1162, 1.0
          %v1183 = vsub.f32 %v1164, 1.0
          %v1184 = vsub.f32 %v1166, 1.0
          %v1185 = vsub.f32 %v1168, 1.0
          %v1186 = vsub.f32 %v1170, 1.0
          %v1187 = vmul.f32 %v1171, 1.6732632
          %v1188 = vmul.f32 %v1172, 1.6732632
          %v1189 = vmul.f32 %v1173, 1.6732632
          %v1190 = vmul.f32 %v1174, 1.6732632
          %v1191 = vmul.f32 %v1175, 1.6732632
          %v1192 = vmul.f32 %v1176, 1.6732632
          %v1193 = vmul.f32 %v1177, 1.6732632
          %v1194 = vmul.f32 %v1178, 1.6732632
          %v1195 = vmul.f32 %v1179, 1.6732632
          %v1196 = vmul.f32 %v1180, 1.6732632
          %v1197 = vmul.f32 %v1181, 1.6732632
          %v1198 = vmul.f32 %v1182, 1.6732632
          %v1199 = vmul.f32 %v1183, 1.6732632
          %v1200 = vmul.f32 %v1184, 1.6732632
          %v1201 = vmul.f32 %v1185, 1.6732632
          %v1202 = vmul.f32 %v1186, 1.6732632
          %v1203 = vsel %vm1123, %v1102, %v1187
          %v1204 = vsel %vm1124, %v1103, %v1188
          %v1205 = vsel %vm1125, %v1104, %v1189
          %v1206 = vsel %vm1126, %v1105, %v1190
          %v1207 = vsel %vm1127, %v1106, %v1191
          %v1208 = vsel %vm1128, %v1107, %v1192
          %v1209 = vsel %vm1129, %v1108, %v1193
          %v1210 = vsel %vm1130, %v1109, %v1194
          %v1211 = vsel %vm1131, %v1110, %v1195
          %v1212 = vsel %vm1132, %v1111, %v1196
          %v1213 = vsel %vm1133, %v1112, %v1197
          %v1214 = vsel %vm1134, %v1113, %v1198
          %v1215 = vsel %vm1135, %v1114, %v1199
          %v1216 = vsel %vm1136, %v1115, %v1200
          %v1217 = vsel %vm1137, %v1116, %v1201
          %v1218 = vsel %vm1138, %v1117, %v1202
          %v1219 = vmul.f32 %v1203, 1.050701
          %v1220 = vmul.f32 %v1204, 1.050701
          %v1221 = vmul.f32 %v1205, 1.050701
          %v1222 = vmul.f32 %v1206, 1.050701
          %v1223 = vmul.f32 %v1207, 1.050701
          %v1224 = vmul.f32 %v1208, 1.050701
          %v1225 = vmul.f32 %v1209, 1.050701
          %v1226 = vmul.f32 %v1210, 1.050701
          %v1227 = vmul.f32 %v1211, 1.050701
          %v1228 = vmul.f32 %v1212, 1.050701
          %v1229 = vmul.f32 %v1213, 1.050701
          %v1230 = vmul.f32 %v1214, 1.050701
          %v1231 = vmul.f32 %v1215, 1.050701
          %v1232 = vmul.f32 %v1216, 1.050701
          %v1233 = vmul.f32 %v1217, 1.050701
          %v1234 = vmul.f32 %v1218, 1.050701
          %v1235 = vpack.c.bf16 %v1220, %v1219
          %v1236 = vpack.c.bf16 %v1222, %v1221
          %v1237 = vpack.c.bf16 %v1224, %v1223
          %v1238 = vpack.c.bf16 %v1226, %v1225
          %v1239 = vpack.c.bf16 %v1228, %v1227
          %v1240 = vpack.c.bf16 %v1230, %v1229
          %v1241 = vpack.c.bf16 %v1232, %v1231
          %v1242 = vpack.c.bf16 %v1234, %v1233
          %v1251 = vunpack.c.l.b16 %v1235
          %v1252 = vunpack.c.h.b16 %v1235
          %v1253 = vunpack.c.l.b16 %v1236
          %v1254 = vunpack.c.h.b16 %v1236
          %v1255 = vunpack.c.l.b16 %v1237
          %v1256 = vunpack.c.h.b16 %v1237
          %v1257 = vunpack.c.l.b16 %v1238
          %v1258 = vunpack.c.h.b16 %v1238
          %v1259 = vunpack.c.l.b16 %v1239
          %v1260 = vunpack.c.h.b16 %v1239
          %v1261 = vunpack.c.l.b16 %v1240
          %v1262 = vunpack.c.h.b16 %v1240
          %v1263 = vunpack.c.l.b16 %v1241
          %v1264 = vunpack.c.h.b16 %v1241
          %v1265 = vunpack.c.l.b16 %v1242
          %v1266 = vunpack.c.h.b16 %v1242
          %v1267 = vpack.c.b16 %v1251, %v1251
          %v1268 = vpack.c.b16 %v1252, %v1252
          %v1269 = vpack.c.b16 %v1253, %v1253
          %v1270 = vpack.c.b16 %v1254, %v1254
          %v1271 = vpack.c.b16 %v1255, %v1255
          %v1272 = vpack.c.b16 %v1256, %v1256
          %v1273 = vpack.c.b16 %v1257, %v1257
          %v1274 = vpack.c.b16 %v1258, %v1258
          %v1275 = vpack.c.b16 %v1259, %v1259
          %v1276 = vpack.c.b16 %v1260, %v1260
          %v1277 = vpack.c.b16 %v1261, %v1261
          %v1278 = vpack.c.b16 %v1262, %v1262
          %v1279 = vpack.c.b16 %v1263, %v1263
          %v1280 = vpack.c.b16 %v1264, %v1264
          %v1281 = vpack.c.b16 %v1265, %v1265
          %v1282 = vpack.c.b16 %v1266, %v1266
          %s1299 = smul.u32 %s368, 32
          %s1300 = sadd.s32 %s369, %s1299
          %s1301 = smul.addr %s1300, 4
          %s1302 = scalar_lea.vmem [#allocation2], %s1301
          %1303 = vst [vmem:[%s1302] sm:$0xf] %v1267
          %1304 = vst [vmem:[%s1302 + $0x4] sm:$0xf] %v1268
          %1305 = vst [vmem:[%s1302 + $0x8] sm:$0xf] %v1269
          %1306 = vst [vmem:[%s1302 + $0xc] sm:$0xf] %v1270
          %1307 = vst [vmem:[%s1302 + $0x10] sm:$0xf] %v1271
          %1308 = vst [vmem:[%s1302 + $0x14] sm:$0xf] %v1272
          %1309 = vst [vmem:[%s1302 + $0x18] sm:$0xf] %v1273
          %1310 = vst [vmem:[%s1302 + $0x1c] sm:$0xf] %v1274
          %1311 = vst [vmem:[%s1302 + $0x20] sm:$0xf] %v1275
          %1312 = vst [vmem:[%s1302 + $0x24] sm:$0xf] %v1276
          %1313 = vst [vmem:[%s1302 + $0x28] sm:$0xf] %v1277
          %1314 = vst [vmem:[%s1302 + $0x2c] sm:$0xf] %v1278
          %1315 = vst [vmem:[%s1302 + $0x30] sm:$0xf] %v1279
          %1316 = vst [vmem:[%s1302 + $0x34] sm:$0xf] %v1280
          %1317 = vst [vmem:[%s1302 + $0x38] sm:$0xf] %v1281
          %1318 = vst [vmem:[%s1302 + $0x3c] sm:$0xf] %v1282
        $region60: #{tpu_custom_call.1} parent=39 // pred_fallthru
          _
        // Predicated region
        $region61: #{tpu_custom_call.1} parent=39 // pred_check
          %p1319 = pneg %p1118
        $region62: #{tpu_custom_call.1} parent=39 // pred_check_branch
          %1321 = sbr.rel (%p1319) target = $region64
        $region63: #{tpu_custom_call.1} parent=39 // pred_region
          %v1322 = vld [vmem:[%s4] sm:$0x1]
          %vm1323 = vcmp.gt.f32.partialorder %v1322, 0.0
          %v1324 = vsel %vm1323, 1, 0
          %v1325 = vlaneseq
          %v1326 = vshrl.u32 %v1325, 7
          %v1327 = vsub.s32 0, %v1326
          %v1328 = vrot.slane %v1324, %v1327
          %vm1329 = vcmp.eq.s32.totalorder %v1328, 1
          %v1330 = vsel %vm1329, %v1102, -1e+30
          %v1331 = vsel %vm1329, %v1103, -1e+30
          %v1332 = vsel %vm1329, %v1104, -1e+30
          %v1333 = vsel %vm1329, %v1105, -1e+30
          %v1334 = vsel %vm1329, %v1106, -1e+30
          %v1335 = vsel %vm1329, %v1107, -1e+30
          %v1336 = vsel %vm1329, %v1108, -1e+30
          %v1337 = vsel %vm1329, %v1109, -1e+30
          %v1338 = vsel %vm1329, %v1110, -1e+30
          %v1339 = vsel %vm1329, %v1111, -1e+30
          %v1340 = vsel %vm1329, %v1112, -1e+30
          %v1341 = vsel %vm1329, %v1113, -1e+30
          %v1342 = vsel %vm1329, %v1114, -1e+30
          %v1343 = vsel %vm1329, %v1115, -1e+30
          %v1344 = vsel %vm1329, %v1116, -1e+30
          %v1345 = vsel %vm1329, %v1117, -1e+30
          %1346 = vmax.xlane.f32.xlu0 %v1330
          %v1347 = vpop.xlane.xlu0 %1346
          %1348 = vmax.xlane.f32.xlu0 %v1331
          %v1349 = vpop.xlane.xlu0 %1348
          %1350 = vmax.xlane.f32.xlu0 %v1332
          %v1351 = vpop.xlane.xlu0 %1350
          %1352 = vmax.xlane.f32.xlu0 %v1333
          %v1353 = vpop.xlane.xlu0 %1352
          %1354 = vmax.xlane.f32.xlu0 %v1334
          %v1355 = vpop.xlane.xlu0 %1354
          %1356 = vmax.xlane.f32.xlu0 %v1335
          %v1357 = vpop.xlane.xlu0 %1356
          %1358 = vmax.xlane.f32.xlu0 %v1336
          %v1359 = vpop.xlane.xlu0 %1358
          %1360 = vmax.xlane.f32.xlu0 %v1337
          %v1361 = vpop.xlane.xlu0 %1360
          %1362 = vmax.xlane.f32.xlu0 %v1338
          %v1363 = vpop.xlane.xlu0 %1362
          %1364 = vmax.xlane.f32.xlu0 %v1339
          %v1365 = vpop.xlane.xlu0 %1364
          %1366 = vmax.xlane.f32.xlu0 %v1340
          %v1367 = vpop.xlane.xlu0 %1366
          %1368 = vmax.xlane.f32.xlu0 %v1341
          %v1369 = vpop.xlane.xlu0 %1368
          %1370 = vmax.xlane.f32.xlu0 %v1342
          %v1371 = vpop.xlane.xlu0 %1370
          %1372 = vmax.xlane.f32.xlu0 %v1343
          %v1373 = vpop.xlane.xlu0 %1372
          %1374 = vmax.xlane.f32.xlu0 %v1344
          %v1375 = vpop.xlane.xlu0 %1374
          %1376 = vmax.xlane.f32.xlu0 %v1345
          %v1377 = vpop.xlane.xlu0 %1376
          %v1378 = vsub.f32 %v1330, %v1347
          %v1379 = vsub.f32 %v1331, %v1349
          %v1380 = vsub.f32 %v1332, %v1351
          %v1381 = vsub.f32 %v1333, %v1353
          %v1382 = vsub.f32 %v1334, %v1355
          %v1383 = vsub.f32 %v1335, %v1357
          %v1384 = vsub.f32 %v1336, %v1359
          %v1385 = vsub.f32 %v1337, %v1361
          %v1386 = vsub.f32 %v1338, %v1363
          %v1387 = vsub.f32 %v1339, %v1365
          %v1388 = vsub.f32 %v1340, %v1367
          %v1389 = vsub.f32 %v1341, %v1369
          %v1390 = vsub.f32 %v1342, %v1371
          %v1391 = vsub.f32 %v1343, %v1373
          %v1392 = vsub.f32 %v1344, %v1375
          %v1393 = vsub.f32 %v1345, %v1377
          %v1394 = vmul.f32 %v1378, 1.442695
          %v1395 = vpow.pop %v1394
          %v1396 = vmul.f32 %v1379, 1.442695
          %v1397 = vpow.pop %v1396
          %v1398 = vmul.f32 %v1380, 1.442695
          %v1399 = vpow.pop %v1398
          %v1400 = vmul.f32 %v1381, 1.442695
          %v1401 = vpow.pop %v1400
          %v1402 = vmul.f32 %v1382, 1.442695
          %v1403 = vpow.pop %v1402
          %v1404 = vmul.f32 %v1383, 1.442695
          %v1405 = vpow.pop %v1404
          %v1406 = vmul.f32 %v1384, 1.442695
          %v1407 = vpow.pop %v1406
          %v1408 = vmul.f32 %v1385, 1.442695
          %v1409 = vpow.pop %v1408
          %v1410 = vmul.f32 %v1386, 1.442695
          %v1411 = vpow.pop %v1410
          %v1412 = vmul.f32 %v1387, 1.442695
          %v1413 = vpow.pop %v1412
          %v1414 = vmul.f32 %v1388, 1.442695
          %v1415 = vpow.pop %v1414
          %v1416 = vmul.f32 %v1389, 1.442695
          %v1417 = vpow.pop %v1416
          %v1418 = vmul.f32 %v1390, 1.442695
          %v1419 = vpow.pop %v1418
          %v1420 = vmul.f32 %v1391, 1.442695
          %v1421 = vpow.pop %v1420
          %v1422 = vmul.f32 %v1392, 1.442695
          %v1423 = vpow.pop %v1422
          %v1424 = vmul.f32 %v1393, 1.442695
          %v1425 = vpow.pop %v1424
          %v1426 = vsel %vm1329, %v1395, 0.0
          %v1427 = vsel %vm1329, %v1397, 0.0
          %v1428 = vsel %vm1329, %v1399, 0.0
          %v1429 = vsel %vm1329, %v1401, 0.0
          %v1430 = vsel %vm1329, %v1403, 0.0
          %v1431 = vsel %vm1329, %v1405, 0.0
          %v1432 = vsel %vm1329, %v1407, 0.0
          %v1433 = vsel %vm1329, %v1409, 0.0
          %v1434 = vsel %vm1329, %v1411, 0.0
          %v1435 = vsel %vm1329, %v1413, 0.0
          %v1436 = vsel %vm1329, %v1415, 0.0
          %v1437 = vsel %vm1329, %v1417, 0.0
          %v1438 = vsel %vm1329, %v1419, 0.0
          %v1439 = vsel %vm1329, %v1421, 0.0
          %v1440 = vsel %vm1329, %v1423, 0.0
          %v1441 = vsel %vm1329, %v1425, 0.0
          %1442 = vadd.xlane.f32.xlu0 %v1426
          %v1443 = vpop.xlane.xlu0 %1442
          %1444 = vadd.xlane.f32.xlu0 %v1427
          %v1445 = vpop.xlane.xlu0 %1444
          %1446 = vadd.xlane.f32.xlu0 %v1428
          %v1447 = vpop.xlane.xlu0 %1446
          %1448 = vadd.xlane.f32.xlu0 %v1429
          %v1449 = vpop.xlane.xlu0 %1448
          %1450 = vadd.xlane.f32.xlu0 %v1430
          %v1451 = vpop.xlane.xlu0 %1450
          %1452 = vadd.xlane.f32.xlu0 %v1431
          %v1453 = vpop.xlane.xlu0 %1452
          %1454 = vadd.xlane.f32.xlu0 %v1432
          %v1455 = vpop.xlane.xlu0 %1454
          %1456 = vadd.xlane.f32.xlu0 %v1433
          %v1457 = vpop.xlane.xlu0 %1456
          %1458 = vadd.xlane.f32.xlu0 %v1434
          %v1459 = vpop.xlane.xlu0 %1458
          %1460 = vadd.xlane.f32.xlu0 %v1435
          %v1461 = vpop.xlane.xlu0 %1460
          %1462 = vadd.xlane.f32.xlu0 %v1436
          %v1463 = vpop.xlane.xlu0 %1462
          %1464 = vadd.xlane.f32.xlu0 %v1437
          %v1465 = vpop.xlane.xlu0 %1464
          %1466 = vadd.xlane.f32.xlu0 %v1438
          %v1467 = vpop.xlane.xlu0 %1466
          %1468 = vadd.xlane.f32.xlu0 %v1439
          %v1469 = vpop.xlane.xlu0 %1468
          %1470 = vadd.xlane.f32.xlu0 %v1440
          %v1471 = vpop.xlane.xlu0 %1470
          %1472 = vadd.xlane.f32.xlu0 %v1441
          %v1473 = vpop.xlane.xlu0 %1472
          %v1474 = vrcp.pop %v1443
          %v1475 = vmul.f32 %v1426, %v1474
          %v1476 = vrcp.pop %v1445
          %v1477 = vmul.f32 %v1427, %v1476
          %v1478 = vrcp.pop %v1447
          %v1479 = vmul.f32 %v1428, %v1478
          %v1480 = vrcp.pop %v1449
          %v1481 = vmul.f32 %v1429, %v1480
          %v1482 = vrcp.pop %v1451
          %v1483 = vmul.f32 %v1430, %v1482
          %v1484 = vrcp.pop %v1453
          %v1485 = vmul.f32 %v1431, %v1484
          %v1486 = vrcp.pop %v1455
          %v1487 = vmul.f32 %v1432, %v1486
          %v1488 = vrcp.pop %v1457
          %v1489 = vmul.f32 %v1433, %v1488
          %v1490 = vrcp.pop %v1459
          %v1491 = vmul.f32 %v1434, %v1490
          %v1492 = vrcp.pop %v1461
          %v1493 = vmul.f32 %v1435, %v1492
          %v1494 = vrcp.pop %v1463
          %v1495 = vmul.f32 %v1436, %v1494
          %v1496 = vrcp.pop %v1465
          %v1497 = vmul.f32 %v1437, %v1496
          %v1498 = vrcp.pop %v1467
          %v1499 = vmul.f32 %v1438, %v1498
          %v1500 = vrcp.pop %v1469
          %v1501 = vmul.f32 %v1439, %v1500
          %v1502 = vrcp.pop %v1471
          %v1503 = vmul.f32 %v1440, %v1502
          %v1504 = vrcp.pop %v1473
          %v1505 = vmul.f32 %v1441, %v1504
          %s1506 = scalar_lea.vmem [#allocation9], %s285
          %1507 = vst [vmem:[%s1506] sm:$0xff] %v1475
          %1508 = vst [vmem:[%s1506 + $0x8] sm:$0xff] %v1477
          %1509 = vst [vmem:[%s1506 + $0x10] sm:$0xff] %v1479
          %1510 = vst [vmem:[%s1506 + $0x18] sm:$0xff] %v1481
          %1511 = vst [vmem:[%s1506 + $0x20] sm:$0xff] %v1483
          %1512 = vst [vmem:[%s1506 + $0x28] sm:$0xff] %v1485
          %1513 = vst [vmem:[%s1506 + $0x30] sm:$0xff] %v1487
          %1514 = vst [vmem:[%s1506 + $0x38] sm:$0xff] %v1489
          %1515 = vst [vmem:[%s1506 + $0x40] sm:$0xff] %v1491
          %1516 = vst [vmem:[%s1506 + $0x48] sm:$0xff] %v1493
          %1517 = vst [vmem:[%s1506 + $0x50] sm:$0xff] %v1495
          %1518 = vst [vmem:[%s1506 + $0x58] sm:$0xff] %v1497
          %1519 = vst [vmem:[%s1506 + $0x60] sm:$0xff] %v1499
          %1520 = vst [vmem:[%s1506 + $0x68] sm:$0xff] %v1501
          %1521 = vst [vmem:[%s1506 + $0x70] sm:$0xff] %v1503
          %1522 = vst [vmem:[%s1506 + $0x78] sm:$0xff] %v1505
        $region64: #{tpu_custom_call.1} parent=39 // pred_fallthru
          _
        // Predicated region
        $region65: #{tpu_custom_call.1} parent=39 // pred_check
          %p1523 = pneg %p159
        $region66: #{tpu_custom_call.1} parent=39 // pred_check_branch
          %1525 = sbr.rel (%p1523) target = $region68
        $region67: #{tpu_custom_call.1} parent=39 // pred_region
          %s1527 = ssub.s32 4096, 4096
          %1528 = vsyncadd [#allocation5], %s1527
          %s1529 = sshll.u32 [#allocation9], 4
          %s1530 = int_to_ptr.vmem [resolvable:$true] %s1529
          %1535 = dma.vmem_to_hbm [thread:$0]  %s1530, 4096, %s5, [#allocation5], 128, 128, 8
        $region68: #{tpu_custom_call.1} parent=39 // pred_fallthru
          _
        // Predicated region
        $region69: #{tpu_custom_call.1} parent=39 // pred_check
          %p1536 = pneg %p159
        $region70: #{tpu_custom_call.1} parent=39 // pred_check_branch
          %1538 = sbr.rel (%p1536) target = $region72
        $region71: #{tpu_custom_call.1} parent=39 // pred_region
          %1539 = dma.done [#allocation5], 4096
        $region72: #{tpu_custom_call.1} parent=39 // pred_fallthru
          _
      $region40: #{tpu_custom_call.1} parent=5 // pred_fallthru
        _
      %p1540 = scmp.le.s32.totalorder 2, %s14
      // Predicated region
      $region73: #{tpu_custom_call.1} parent=5 // pred_check
        %p1541 = pneg %p1540
      $region74: #{tpu_custom_call.1} parent=5 // pred_check_branch
        %1543 = sbr.rel (%p1541) target = $region76
      $region75: #{tpu_custom_call.1} parent=5 // pred_region
        %s1544 = ssub.s32 %s14, 2
      $region76: #{tpu_custom_call.1} parent=5 // pred_fallthru
        _
    $region6: #{tpu_custom_call.1} parent=1 // loop_footer
      %s18 = sadd.s32 1, %s14
    $region7: #{tpu_custom_call.1} parent=1 // loop_footer_branch
      %13 = sbr.rel target = $region3
    $region8: #{tpu_custom_call.1} parent=1 // loop_exit
      _
    %1545 = vsyncpa [#allocation4], 1
    %s1546 = scalar_lea.sflag [#allocation4], 1
    %1547 = vsyncpa %s1546, 1
    %1548 = vsyncpa [#allocation7], 1
    %1549 = vsyncpa [#allocation5], 1
    %s1550 = scalar_lea.sflag [#allocation5], 1
    %1551 = vsyncpa %s1550, 1

</llo_original>
